<compile_context>
chip_gen: v7x
topology: tpu7x:2x2x1
jax: 0.10.0
libtpu: 0.0.40
codegen_flags: <defaults>
</compile_context>

<pallas_src>
import functools

import jax
import jax.numpy as jnp
import numpy as np
from jax.experimental import pallas as pl
from jax.experimental.pallas import tpu as pltpu

EPS = 1e-5   # nn.BatchNorm2d default


def _block_kernel(x_ref, wb1_ref, b1_ref, g1_ref, be1_ref,
                  wb2_ref, b2_ref, g2_ref, be2_ref, psel_ref,
                  o_ref, *, inv_count):
    """conv3x3 -> BN(batch stats) -> ReLU, twice, in one invocation.

    x_ref    : (N, H, W*Cin)  f32 lane-dense activations (no halo)
    wb*_ref  : (3, W*Cin_or_Cout, W*Cout) bf16 banded weight matrices
               (the W shift and the 'same' W zero-padding live in the band
               structure; the leading 3 is the H tap dy = 0, 1, 2)
    b/g/be   : (1, W*Cout) f32 lane-tiled conv bias / BN gamma / BN beta
    psel_ref : (W*Cout, W*Cout) bf16 with psel[x*Co+c, x'*Co+c'] = (c == c')
    o_ref    : (N, H, W*Cout) f32
    """
    N, H, WCi = x_ref.shape
    WCo = o_ref.shape[-1]
    M = N * H

    # (M, M) H-shift matrices, built in registers (no HBM traffic, no scratch)
    #   s_up @ X : row m holds X[m-1] (input row h-1), zero at h == 0
    #   s_dn @ X : row m holds X[m+1] (input row h+1), zero at h == H-1
    rows = jax.lax.broadcasted_iota(jnp.int32, (M, M), 0)
    cols = jax.lax.broadcasted_iota(jnp.int32, (M, M), 1)
    s_up = jnp.where((cols == rows - 1) & ((rows % H) != 0), 1.0, 0.0)
    s_dn = jnp.where((cols == rows + 1) & ((rows % H) != (H - 1)), 1.0, 0.0)

    psel = psel_ref[...].astype(jnp.float32)   # 0/1 -> bf16 storage is exact

    def conv3x3(x2d, wb_ref, bias):
        # Three dense (M, W*C) @ (W*C, W*Cout) matmuls, one per H tap; the
        # H halo rides the tiny shift matmuls, the W halo lives in the bands.
        x_up = jnp.dot(s_up, x2d, preferred_element_type=jnp.float32)
        x_dn = jnp.dot(s_dn, x2d, preferred_element_type=jnp.float32)
        acc = jnp.dot(x_up, wb_ref[0].astype(jnp.float32),
                      preferred_element_type=jnp.float32)
        acc = acc + jnp.dot(x2d, wb_ref[1].astype(jnp.float32),
                            preferred_element_type=jnp.float32)
        acc = acc + jnp.dot(x_dn, wb_ref[2].astype(jnp.float32),
                            preferred_element_type=jnp.float32)
        return acc + bias

    def bn_relu(acc, g, be):
        # One-pass batch stats in f32; sum and sum-of-squares are stacked so
        # the pool-over-W + lane broadcast is a single (2, WCo) matmul.
        s12 = jnp.concatenate(
            [jnp.sum(acc, axis=0, keepdims=True),
             jnp.sum(acc * acc, axis=0, keepdims=True)], axis=0)
        pooled = jnp.dot(s12, psel, preferred_element_type=jnp.float32)
        mean = pooled[0:1, :] * inv_count
        var = pooled[1:2, :] * inv_count - mean * mean
        scale = g * jax.lax.rsqrt(var + EPS)
        shift = be - mean * scale
        return jnp.maximum(acc * scale + shift, 0.0)

    x2d = x_ref[...].reshape(M, WCi)

    # ---------------- conv1 + BN + ReLU ----------------
    y1 = bn_relu(conv3x3(x2d, wb1_ref, b1_ref[...]), g1_ref[...], be1_ref[...])
    # ---------------- conv2 + BN + ReLU ----------------
    y2 = bn_relu(conv3x3(y1, wb2_ref, b2_ref[...]), g2_ref[...], be2_ref[...])

    o_ref[...] = y2.reshape(N, H, WCo)        # lane-dense (256-wide) stores


def _band_weights(w, Wdim):
    """HWIO (kh, kw, Ci, Co) -> (kh, Wdim*Ci, Wdim*Co) banded matrices.

    wb[dy, x_in*Ci+ci, x_out*Co+co] = w[dy, x_in - x_out + kw//2, ci, co]
    when that tap is in range, else 0 (this encodes the 'same' W padding).
    """
    kh, kw, Ci, Co = w.shape
    xin = jnp.arange(Wdim)[:, None]
    xout = jnp.arange(Wdim)[None, :]
    dx = xin - xout + (kw // 2)
    valid = (dx >= 0) & (dx < kw)
    dx_c = jnp.clip(dx, 0, kw - 1)
    wb = w[:, dx_c, :, :]                                    # (kh, W, W, Ci, Co)
    wb = jnp.where(valid[None, :, :, None, None], wb, 0.0)
    wb = jnp.transpose(wb, (0, 1, 3, 2, 4))                  # (kh, Win, Ci, Wout, Co)
    return wb.reshape(kh, Wdim * Ci, Wdim * Co)


def _lane_tile(v, Wdim):
    """(..., Co) -> (1, Wdim*Co) with out[0, x*Co + c] = v[c]."""
    v = v.reshape(1, -1)
    return jnp.broadcast_to(v, (Wdim, v.shape[-1])).reshape(1, -1)


def prepare_params(params, Wdim):
    """One-time preprocessing, hoisted out of the forward path.

    Banded weights / psel dominate the kernel's HBM traffic, so they are kept
    in bf16 (psel exact; conv weights ~1e-3 relative storage rounding).  All
    in-kernel accumulation stays f32.
    """
    f32 = jnp.float32
    Cout = params["w1"].shape[-1]
    return {
        "wb1": _band_weights(params["w1"].astype(f32), Wdim).astype(jnp.bfloat16),
        "wb2": _band_weights(params["w2"].astype(f32), Wdim).astype(jnp.bfloat16),
        "b1": _lane_tile(params["b1"].astype(f32), Wdim),
        "g1": _lane_tile(params["g1"].astype(f32), Wdim),
        "be1": _lane_tile(params["be1"].astype(f32), Wdim),
        "b2": _lane_tile(params["b2"].astype(f32), Wdim),
        "g2": _lane_tile(params["g2"].astype(f32), Wdim),
        "be2": _lane_tile(params["be2"].astype(f32), Wdim),
        "psel": jnp.tile(jnp.eye(Cout, dtype=f32), (Wdim, Wdim)).astype(jnp.bfloat16),
    }


@jax.jit
def encoder_decoder_block(x_nchw, prepped):
    """Forward pass: NCHW in / NCHW out (PyTorch convention)."""
    N, Cin, H, W = x_nchw.shape
    WCo = prepped["wb1"].shape[-1]
    Cout = WCo // W

    # Lane-dense activation layout (N, H, W*Cin); no halo pad (handled in-kernel).
    x = jnp.transpose(x_nchw, (0, 2, 3, 1)).astype(jnp.float32)   # NHWC
    x = x.reshape(N, H, W * Cin)

    kernel = functools.partial(_block_kernel,
                               inv_count=1.0 / float(N * H * W))

    out = pl.pallas_call(
        kernel,
        out_shape=jax.ShapeDtypeStruct((N, H, WCo), jnp.float32),
        compiler_params=pltpu.CompilerParams(
            vmem_limit_bytes=32 * 1024 * 1024),
    )(x, prepped["wb1"], prepped["b1"], prepped["g1"], prepped["be1"],
      prepped["wb2"], prepped["b2"], prepped["g2"], prepped["be2"],
      prepped["psel"])

    out = out.reshape(N, H, W, Cout)
    return jnp.transpose(out, (0, 3, 1, 2))                        # -> NCHW


def make_params(key, in_filters=8, out_filters=16):
    """Deterministic synthetic parameter init (shapes match the nn.Module)."""
    ks = jax.random.split(key, 8)
    return {
        # conv weights stored HWIO: (kh, kw, Cin, Cout)
        "w1": jax.random.normal(ks[0], (3, 3, in_filters, out_filters), jnp.float32) * 0.1,
        "b1": jax.random.normal(ks[1], (1, out_filters), jnp.float32) * 0.1,
        "g1": 1.0 + jax.random.normal(ks[2], (1, out_filters), jnp.float32) * 0.05,
        "be1": jax.random.normal(ks[3], (1, out_filters), jnp.float32) * 0.05,
        "w2": jax.random.normal(ks[4], (3, 3, out_filters, out_filters), jnp.float32) * 0.1,
        "b2": jax.random.normal(ks[5], (1, out_filters), jnp.float32) * 0.1,
        "g2": 1.0 + jax.random.normal(ks[6], (1, out_filters), jnp.float32) * 0.05,
        "be2": jax.random.normal(ks[7], (1, out_filters), jnp.float32) * 0.05,
    }


def ref_forward(x_nchw, p):
    """Pure-JAX f32 reference (identical to the PyTorch forward in train mode)."""
    dn = ("NCHW", "HWIO", "NCHW")

    def conv_bn_relu(x, w, b, g, be):
        y = jax.lax.conv_general_dilated(x, w, (1, 1), ((1, 1), (1, 1)),
                                         dimension_numbers=dn)
        y = y + b.reshape(1, -1, 1, 1)
        mean = jnp.mean(y, axis=(0, 2, 3), keepdims=True)
        var = jnp.mean((y - mean) ** 2, axis=(0, 2, 3), keepdims=True)
        y = (y - mean) / jnp.sqrt(var + EPS) * g.reshape(1, -1, 1, 1) \
            + be.reshape(1, -1, 1, 1)
        return jnp.maximum(y, 0.0)

    y = conv_bn_relu(x_nchw, p["w1"], p["b1"], p["g1"], p["be1"])
    y = conv_bn_relu(y, p["w2"], p["b2"], p["g2"], p["be2"])
    return y


if __name__ == "__main__":
    key = jax.random.PRNGKey(0)
    k_x, k_p = jax.random.split(key)

    N, Cin, H, W = 2, 8, 16, 16          # NCHW, matches in_filters=8 default
    x = jax.random.normal(k_x, (N, Cin, H, W), jnp.float32)
    params = make_params(k_p, in_filters=Cin, out_filters=16)

    # One-time init (banded bf16 weights etc.) — NOT in the per-call path.
    prepped = prepare_params(params, W)

    out = encoder_decoder_block(x, prepped)
    out = jax.block_until_ready(out)

    ref = jax.block_until_ready(ref_forward(x, params))
    # Tolerance covers the bf16 *storage* rounding of the conv weights
    # (accumulation is f32 everywhere); structural bugs would be O(0.1 - 1).
    np.testing.assert_allclose(np.asarray(out), np.asarray(ref),
                               rtol=2e-2, atol=2e-2)
    assert out.shape == (N, 16, H, W)

    print("KERNEL_OK")
</pallas_src>

<mosaic_0001>
module attributes {stable_mosaic.version = 11 : i64} {
  func.func @_block_kernel(%arg0: memref<2x16x128xf32, #tpu.memory_space<vmem>>, %arg1: memref<3x128x256xbf16, #tpu.memory_space<vmem>>, %arg2: memref<1x256xf32, #tpu.memory_space<vmem>>, %arg3: memref<1x256xf32, #tpu.memory_space<vmem>>, %arg4: memref<1x256xf32, #tpu.memory_space<vmem>>, %arg5: memref<3x256x256xbf16, #tpu.memory_space<vmem>>, %arg6: memref<1x256xf32, #tpu.memory_space<vmem>>, %arg7: memref<1x256xf32, #tpu.memory_space<vmem>>, %arg8: memref<1x256xf32, #tpu.memory_space<vmem>>, %arg9: memref<256x256xbf16, #tpu.memory_space<vmem>>, %arg10: memref<2x16x256xf32, #tpu.memory_space<vmem>>) attributes {dimension_semantics = [], scalar_prefetch = 0 : i64, scratch_operands = 0 : i64, tpu.core_type = #tpu.core_type<tc>} {
    %0 = tpu.iota {dimensions = array<i32: 0>} : vector<32x32xi32>
    %1 = tpu.iota {dimensions = array<i32: 1>} : vector<32x32xi32>
    %c1_i32 = arith.constant 1 : i32
    %2 = vector.broadcast %c1_i32 : i32 to vector<32x32xi32>
    %3 = arith.subi %0, %2 : vector<32x32xi32>
    %4 = arith.cmpi eq, %1, %3 : vector<32x32xi32>
    %c16_i32 = arith.constant 16 : i32
    %c0_i32 = arith.constant 0 : i32
    %5 = arith.cmpi eq, %c16_i32, %c0_i32 : i32
    %c1_i32_0 = arith.constant 1 : i32
    %6 = arith.select %5, %c1_i32_0, %c16_i32 : i32
    %7 = vector.broadcast %6 : i32 to vector<32x32xi32>
    %8 = arith.remsi %0, %7 : vector<32x32xi32>
    %c0_i32_1 = arith.constant 0 : i32
    %9 = vector.broadcast %c0_i32_1 : i32 to vector<32x32xi32>
    %10 = arith.cmpi ne, %8, %9 : vector<32x32xi32>
    %c0_i32_2 = arith.constant 0 : i32
    %11 = vector.broadcast %c0_i32_2 : i32 to vector<32x32xi32>
    %12 = arith.cmpi slt, %8, %11 : vector<32x32xi32>
    %c0_i32_3 = arith.constant 0 : i32
    %13 = arith.cmpi slt, %6, %c0_i32_3 : i32
    %14 = vector.broadcast %13 : i1 to vector<32x32xi1>
    %15 = vector.broadcast %14 : vector<32x32xi1> to vector<32x32xi1>
    %16 = arith.xori %12, %15 : vector<32x32xi1>
    %17 = arith.andi %16, %10 : vector<32x32xi1>
    %18 = vector.broadcast %6 : i32 to vector<32x32xi32>
    %19 = arith.addi %8, %18 : vector<32x32xi32>
    %20 = arith.select %17, %19, %8 : vector<32x32xi1>, vector<32x32xi32>
    %c0_i32_4 = arith.constant 0 : i32
    %21 = vector.broadcast %c0_i32_4 : i32 to vector<32x32xi32>
    %22 = arith.cmpi ne, %20, %21 : vector<32x32xi32>
    %23 = arith.andi %4, %22 : vector<32x32xi1>
    %cst = arith.constant 1.000000e+00 : f32
    %cst_5 = arith.constant 0.000000e+00 : f32
    %24 = vector.broadcast %cst : f32 to vector<32x32xf32>
    %25 = vector.broadcast %cst_5 : f32 to vector<32x32xf32>
    %26 = arith.select %23, %24, %25 : vector<32x32xi1>, vector<32x32xf32>
    %c1_i32_6 = arith.constant 1 : i32
    %27 = vector.broadcast %c1_i32_6 : i32 to vector<32x32xi32>
    %28 = arith.addi %0, %27 : vector<32x32xi32>
    %29 = arith.cmpi eq, %1, %28 : vector<32x32xi32>
    %c16_i32_7 = arith.constant 16 : i32
    %c0_i32_8 = arith.constant 0 : i32
    %30 = arith.cmpi eq, %c16_i32_7, %c0_i32_8 : i32
    %c1_i32_9 = arith.constant 1 : i32
    %31 = arith.select %30, %c1_i32_9, %c16_i32_7 : i32
    %32 = vector.broadcast %31 : i32 to vector<32x32xi32>
    %33 = arith.remsi %0, %32 : vector<32x32xi32>
    %c0_i32_10 = arith.constant 0 : i32
    %34 = vector.broadcast %c0_i32_10 : i32 to vector<32x32xi32>
    %35 = arith.cmpi ne, %33, %34 : vector<32x32xi32>
    %c0_i32_11 = arith.constant 0 : i32
    %36 = vector.broadcast %c0_i32_11 : i32 to vector<32x32xi32>
    %37 = arith.cmpi slt, %33, %36 : vector<32x32xi32>
    %c0_i32_12 = arith.constant 0 : i32
    %38 = arith.cmpi slt, %31, %c0_i32_12 : i32
    %39 = vector.broadcast %38 : i1 to vector<32x32xi1>
    %40 = vector.broadcast %39 : vector<32x32xi1> to vector<32x32xi1>
    %41 = arith.xori %37, %40 : vector<32x32xi1>
    %42 = arith.andi %41, %35 : vector<32x32xi1>
    %43 = vector.broadcast %31 : i32 to vector<32x32xi32>
    %44 = arith.addi %33, %43 : vector<32x32xi32>
    %45 = arith.select %42, %44, %33 : vector<32x32xi1>, vector<32x32xi32>
    %c15_i32 = arith.constant 15 : i32
    %46 = vector.broadcast %c15_i32 : i32 to vector<32x32xi32>
    %47 = arith.cmpi ne, %45, %46 : vector<32x32xi32>
    %48 = arith.andi %29, %47 : vector<32x32xi1>
    %cst_13 = arith.constant 1.000000e+00 : f32
    %cst_14 = arith.constant 0.000000e+00 : f32
    %49 = vector.broadcast %cst_13 : f32 to vector<32x32xf32>
    %50 = vector.broadcast %cst_14 : f32 to vector<32x32xf32>
    %51 = arith.select %48, %49, %50 : vector<32x32xi1>, vector<32x32xf32>
    %c0 = arith.constant 0 : index
    %c0_15 = arith.constant 0 : index
    %52 = vector.load %arg9[%c0, %c0_15] : memref<256x256xbf16, #tpu.memory_space<vmem>>, vector<256x256xbf16>
    %53 = arith.extf %52 : vector<256x256xbf16> to vector<256x256xf32>
    %c0_16 = arith.constant 0 : index
    %c0_17 = arith.constant 0 : index
    %c0_18 = arith.constant 0 : index
    %54 = vector.load %arg0[%c0_16, %c0_17, %c0_18] : memref<2x16x128xf32, #tpu.memory_space<vmem>>, vector<2x16x128xf32>
    %55 = vector.shape_cast %54 : vector<2x16x128xf32> to vector<32x128xf32>
    %c0_19 = arith.constant 0 : index
    %c0_20 = arith.constant 0 : index
    %56 = vector.load %arg2[%c0_19, %c0_20] : memref<1x256xf32, #tpu.memory_space<vmem>>, vector<1x256xf32>
    %cst_21 = arith.constant dense<0.000000e+00> : vector<32x128xf32>
    %57 = tpu.matmul %26, %55, %cst_21 {dimension_numbers = #tpu.dot_dimension_numbers<[1], [0], [0], [1], [0, 0, 1, 1], [], []>} : vector<32x32xf32>, vector<32x128xf32>, vector<32x128xf32> -> vector<32x128xf32>
    %cst_22 = arith.constant dense<0.000000e+00> : vector<32x128xf32>
    %58 = tpu.matmul %51, %55, %cst_22 {dimension_numbers = #tpu.dot_dimension_numbers<[1], [0], [0], [1], [0, 0, 1, 1], [], []>} : vector<32x32xf32>, vector<32x128xf32>, vector<32x128xf32> -> vector<32x128xf32>
    %c0_23 = arith.constant 0 : index
    %c0_24 = arith.constant 0 : index
    %c0_25 = arith.constant 0 : index
    %59 = vector.load %arg1[%c0_23, %c0_24, %c0_25] : memref<3x128x256xbf16, #tpu.memory_space<vmem>>, vector<1x128x256xbf16>
    %60 = vector.shape_cast %59 : vector<1x128x256xbf16> to vector<128x256xbf16>
    %61 = arith.extf %60 : vector<128x256xbf16> to vector<128x256xf32>
    %cst_26 = arith.constant dense<0.000000e+00> : vector<32x256xf32>
    %62 = tpu.matmul %57, %61, %cst_26 {dimension_numbers = #tpu.dot_dimension_numbers<[1], [0], [0], [1], [0, 0, 1, 1], [], []>} : vector<32x128xf32>, vector<128x256xf32>, vector<32x256xf32> -> vector<32x256xf32>
    %c1 = arith.constant 1 : index
    %c0_27 = arith.constant 0 : index
    %c0_28 = arith.constant 0 : index
    %63 = vector.load %arg1[%c1, %c0_27, %c0_28] : memref<3x128x256xbf16, #tpu.memory_space<vmem>>, vector<1x128x256xbf16>
    %64 = vector.shape_cast %63 : vector<1x128x256xbf16> to vector<128x256xbf16>
    %65 = arith.extf %64 : vector<128x256xbf16> to vector<128x256xf32>
    %cst_29 = arith.constant dense<0.000000e+00> : vector<32x256xf32>
    %66 = tpu.matmul %55, %65, %cst_29 {dimension_numbers = #tpu.dot_dimension_numbers<[1], [0], [0], [1], [0, 0, 1, 1], [], []>} : vector<32x128xf32>, vector<128x256xf32>, vector<32x256xf32> -> vector<32x256xf32>
    %67 = arith.addf %62, %66 : vector<32x256xf32>
    %c2 = arith.constant 2 : index
    %c0_30 = arith.constant 0 : index
    %c0_31 = arith.constant 0 : index
    %68 = vector.load %arg1[%c2, %c0_30, %c0_31] : memref<3x128x256xbf16, #tpu.memory_space<vmem>>, vector<1x128x256xbf16>
    %69 = vector.shape_cast %68 : vector<1x128x256xbf16> to vector<128x256xbf16>
    %70 = arith.extf %69 : vector<128x256xbf16> to vector<128x256xf32>
    %cst_32 = arith.constant dense<0.000000e+00> : vector<32x256xf32>
    %71 = tpu.matmul %58, %70, %cst_32 {dimension_numbers = #tpu.dot_dimension_numbers<[1], [0], [0], [1], [0, 0, 1, 1], [], []>} : vector<32x128xf32>, vector<128x256xf32>, vector<32x256xf32> -> vector<32x256xf32>
    %72 = arith.addf %67, %71 : vector<32x256xf32>
    %73 = vector.broadcast %56 : vector<1x256xf32> to vector<32x256xf32>
    %74 = arith.addf %72, %73 : vector<32x256xf32>
    %c0_33 = arith.constant 0 : index
    %c0_34 = arith.constant 0 : index
    %75 = vector.load %arg3[%c0_33, %c0_34] : memref<1x256xf32, #tpu.memory_space<vmem>>, vector<1x256xf32>
    %c0_35 = arith.constant 0 : index
    %c0_36 = arith.constant 0 : index
    %76 = vector.load %arg4[%c0_35, %c0_36] : memref<1x256xf32, #tpu.memory_space<vmem>>, vector<1x256xf32>
    %cst_37 = arith.constant dense<0.000000e+00> : vector<256xf32>
    %77 = vector.multi_reduction <add>, %74, %cst_37 [0] : vector<32x256xf32> to vector<256xf32>
    %78 = vector.shape_cast %77 : vector<256xf32> to vector<1x256xf32>
    %79 = arith.mulf %74, %74 : vector<32x256xf32>
    %cst_38 = arith.constant dense<0.000000e+00> : vector<256xf32>
    %80 = vector.multi_reduction <add>, %79, %cst_38 [0] : vector<32x256xf32> to vector<256xf32>
    %81 = vector.shape_cast %80 : vector<256xf32> to vector<1x256xf32>
    %82 = tpu.concatenate %78, %81 in 0 : vector<1x256xf32>, vector<1x256xf32> -> vector<2x256xf32>
    %cst_39 = arith.constant dense<0.000000e+00> : vector<2x256xf32>
    %83 = tpu.matmul %82, %53, %cst_39 {dimension_numbers = #tpu.dot_dimension_numbers<[1], [0], [0], [1], [0, 0, 1, 1], [], []>} : vector<2x256xf32>, vector<256x256xf32>, vector<2x256xf32> -> vector<2x256xf32>
    %84 = vector.extract_strided_slice %83 {offsets = [0, 0], sizes = [1, 256], strides = [1, 1]} : vector<2x256xf32> to vector<1x256xf32>
    %cst_40 = arith.constant 0.001953125 : f32
    %85 = vector.broadcast %cst_40 : f32 to vector<1x256xf32>
    %86 = arith.mulf %84, %85 : vector<1x256xf32>
    %87 = vector.extract_strided_slice %83 {offsets = [1, 0], sizes = [1, 256], strides = [1, 1]} : vector<2x256xf32> to vector<1x256xf32>
    %cst_41 = arith.constant 0.001953125 : f32
    %88 = vector.broadcast %cst_41 : f32 to vector<1x256xf32>
    %89 = arith.mulf %87, %88 : vector<1x256xf32>
    %90 = arith.mulf %86, %86 : vector<1x256xf32>
    %91 = arith.subf %89, %90 : vector<1x256xf32>
    %cst_42 = arith.constant 9.99999974E-6 : f32
    %92 = vector.broadcast %cst_42 : f32 to vector<1x256xf32>
    %93 = arith.addf %91, %92 : vector<1x256xf32>
    %94 = math.rsqrt %93 : vector<1x256xf32>
    %95 = arith.mulf %75, %94 : vector<1x256xf32>
    %96 = arith.mulf %86, %95 : vector<1x256xf32>
    %97 = arith.subf %76, %96 : vector<1x256xf32>
    %98 = vector.broadcast %95 : vector<1x256xf32> to vector<32x256xf32>
    %99 = arith.mulf %74, %98 : vector<32x256xf32>
    %100 = vector.broadcast %97 : vector<1x256xf32> to vector<32x256xf32>
    %101 = arith.addf %99, %100 : vector<32x256xf32>
    %cst_43 = arith.constant 0.000000e+00 : f32
    %102 = vector.broadcast %cst_43 : f32 to vector<32x256xf32>
    %103 = arith.maximumf %101, %102 : vector<32x256xf32>
    %c0_44 = arith.constant 0 : index
    %c0_45 = arith.constant 0 : index
    %104 = vector.load %arg6[%c0_44, %c0_45] : memref<1x256xf32, #tpu.memory_space<vmem>>, vector<1x256xf32>
    %cst_46 = arith.constant dense<0.000000e+00> : vector<32x256xf32>
    %105 = tpu.matmul %26, %103, %cst_46 {dimension_numbers = #tpu.dot_dimension_numbers<[1], [0], [0], [1], [0, 0, 1, 1], [], []>} : vector<32x32xf32>, vector<32x256xf32>, vector<32x256xf32> -> vector<32x256xf32>
    %cst_47 = arith.constant dense<0.000000e+00> : vector<32x256xf32>
    %106 = tpu.matmul %51, %103, %cst_47 {dimension_numbers = #tpu.dot_dimension_numbers<[1], [0], [0], [1], [0, 0, 1, 1], [], []>} : vector<32x32xf32>, vector<32x256xf32>, vector<32x256xf32> -> vector<32x256xf32>
    %c0_48 = arith.constant 0 : index
    %c0_49 = arith.constant 0 : index
    %c0_50 = arith.constant 0 : index
    %107 = vector.load %arg5[%c0_48, %c0_49, %c0_50] : memref<3x256x256xbf16, #tpu.memory_space<vmem>>, vector<1x256x256xbf16>
    %108 = vector.shape_cast %107 : vector<1x256x256xbf16> to vector<256x256xbf16>
    %109 = arith.extf %108 : vector<256x256xbf16> to vector<256x256xf32>
    %cst_51 = arith.constant dense<0.000000e+00> : vector<32x256xf32>
    %110 = tpu.matmul %105, %109, %cst_51 {dimension_numbers = #tpu.dot_dimension_numbers<[1], [0], [0], [1], [0, 0, 1, 1], [], []>} : vector<32x256xf32>, vector<256x256xf32>, vector<32x256xf32> -> vector<32x256xf32>
    %c1_52 = arith.constant 1 : index
    %c0_53 = arith.constant 0 : index
    %c0_54 = arith.constant 0 : index
    %111 = vector.load %arg5[%c1_52, %c0_53, %c0_54] : memref<3x256x256xbf16, #tpu.memory_space<vmem>>, vector<1x256x256xbf16>
    %112 = vector.shape_cast %111 : vector<1x256x256xbf16> to vector<256x256xbf16>
    %113 = arith.extf %112 : vector<256x256xbf16> to vector<256x256xf32>
    %cst_55 = arith.constant dense<0.000000e+00> : vector<32x256xf32>
    %114 = tpu.matmul %103, %113, %cst_55 {dimension_numbers = #tpu.dot_dimension_numbers<[1], [0], [0], [1], [0, 0, 1, 1], [], []>} : vector<32x256xf32>, vector<256x256xf32>, vector<32x256xf32> -> vector<32x256xf32>
    %115 = arith.addf %110, %114 : vector<32x256xf32>
    %c2_56 = arith.constant 2 : index
    %c0_57 = arith.constant 0 : index
    %c0_58 = arith.constant 0 : index
    %116 = vector.load %arg5[%c2_56, %c0_57, %c0_58] : memref<3x256x256xbf16, #tpu.memory_space<vmem>>, vector<1x256x256xbf16>
    %117 = vector.shape_cast %116 : vector<1x256x256xbf16> to vector<256x256xbf16>
    %118 = arith.extf %117 : vector<256x256xbf16> to vector<256x256xf32>
    %cst_59 = arith.constant dense<0.000000e+00> : vector<32x256xf32>
    %119 = tpu.matmul %106, %118, %cst_59 {dimension_numbers = #tpu.dot_dimension_numbers<[1], [0], [0], [1], [0, 0, 1, 1], [], []>} : vector<32x256xf32>, vector<256x256xf32>, vector<32x256xf32> -> vector<32x256xf32>
    %120 = arith.addf %115, %119 : vector<32x256xf32>
    %121 = vector.broadcast %104 : vector<1x256xf32> to vector<32x256xf32>
    %122 = arith.addf %120, %121 : vector<32x256xf32>
    %c0_60 = arith.constant 0 : index
    %c0_61 = arith.constant 0 : index
    %123 = vector.load %arg7[%c0_60, %c0_61] : memref<1x256xf32, #tpu.memory_space<vmem>>, vector<1x256xf32>
    %c0_62 = arith.constant 0 : index
    %c0_63 = arith.constant 0 : index
    %124 = vector.load %arg8[%c0_62, %c0_63] : memref<1x256xf32, #tpu.memory_space<vmem>>, vector<1x256xf32>
    %cst_64 = arith.constant dense<0.000000e+00> : vector<256xf32>
    %125 = vector.multi_reduction <add>, %122, %cst_64 [0] : vector<32x256xf32> to vector<256xf32>
    %126 = vector.shape_cast %125 : vector<256xf32> to vector<1x256xf32>
    %127 = arith.mulf %122, %122 : vector<32x256xf32>
    %cst_65 = arith.constant dense<0.000000e+00> : vector<256xf32>
    %128 = vector.multi_reduction <add>, %127, %cst_65 [0] : vector<32x256xf32> to vector<256xf32>
    %129 = vector.shape_cast %128 : vector<256xf32> to vector<1x256xf32>
    %130 = tpu.concatenate %126, %129 in 0 : vector<1x256xf32>, vector<1x256xf32> -> vector<2x256xf32>
    %cst_66 = arith.constant dense<0.000000e+00> : vector<2x256xf32>
    %131 = tpu.matmul %130, %53, %cst_66 {dimension_numbers = #tpu.dot_dimension_numbers<[1], [0], [0], [1], [0, 0, 1, 1], [], []>} : vector<2x256xf32>, vector<256x256xf32>, vector<2x256xf32> -> vector<2x256xf32>
    %132 = vector.extract_strided_slice %131 {offsets = [0, 0], sizes = [1, 256], strides = [1, 1]} : vector<2x256xf32> to vector<1x256xf32>
    %cst_67 = arith.constant 0.001953125 : f32
    %133 = vector.broadcast %cst_67 : f32 to vector<1x256xf32>
    %134 = arith.mulf %132, %133 : vector<1x256xf32>
    %135 = vector.extract_strided_slice %131 {offsets = [1, 0], sizes = [1, 256], strides = [1, 1]} : vector<2x256xf32> to vector<1x256xf32>
    %cst_68 = arith.constant 0.001953125 : f32
    %136 = vector.broadcast %cst_68 : f32 to vector<1x256xf32>
    %137 = arith.mulf %135, %136 : vector<1x256xf32>
    %138 = arith.mulf %134, %134 : vector<1x256xf32>
    %139 = arith.subf %137, %138 : vector<1x256xf32>
    %cst_69 = arith.constant 9.99999974E-6 : f32
    %140 = vector.broadcast %cst_69 : f32 to vector<1x256xf32>
    %141 = arith.addf %139, %140 : vector<1x256xf32>
    %142 = math.rsqrt %141 : vector<1x256xf32>
    %143 = arith.mulf %123, %142 : vector<1x256xf32>
    %144 = arith.mulf %134, %143 : vector<1x256xf32>
    %145 = arith.subf %124, %144 : vector<1x256xf32>
    %146 = vector.broadcast %143 : vector<1x256xf32> to vector<32x256xf32>
    %147 = arith.mulf %122, %146 : vector<32x256xf32>
    %148 = vector.broadcast %145 : vector<1x256xf32> to vector<32x256xf32>
    %149 = arith.addf %147, %148 : vector<32x256xf32>
    %cst_70 = arith.constant 0.000000e+00 : f32
    %150 = vector.broadcast %cst_70 : f32 to vector<32x256xf32>
    %151 = arith.maximumf %149, %150 : vector<32x256xf32>
    %152 = vector.shape_cast %151 : vector<32x256xf32> to vector<2x16x256xf32>
    %c0_71 = arith.constant 0 : index
    %c0_72 = arith.constant 0 : index
    %c0_73 = arith.constant 0 : index
    %153 = vector.load %arg10[%c0_71, %c0_72, %c0_73] : memref<2x16x256xf32, #tpu.memory_space<vmem>>, vector<2x16x256xf32>
    tpu.vector_store %arg10[%c0_71, %c0_72, %c0_73], %152 {strides = array<i32>} : memref<2x16x256xf32, #tpu.memory_space<vmem>>, vector<2x16x256xf32>,
    return
  }
}

</mosaic_0001>

<llo_original>
// kernel: encoder_decoder_block.1
$region0: #{encoder_decoder_block.1}
  #allocation0 [shape = 'u32[]', space=smem, size = 0x4, offset = 0x4, fixed_abs, tag = 'smem constant byte address 0x4 - core index']
  #allocation1 [shape = 'u32[144,128]{1,0:T(1,128)}', space=vmem, size = 0x12000, scoped, tag = 'internal scratch']
  %s0 = inlined_call_operand.vmem [shape: f32[2,16,128], index: 0, kind: input, shape index: {}]
  %s1 = inlined_call_operand.hbm [shape: bf16[3,128,256], index: 1, kind: input, shape index: {}]
  %s2 = inlined_call_operand.vmem [shape: f32[1,256], index: 2, kind: input, shape index: {}]
  %s3 = inlined_call_operand.vmem [shape: f32[1,256], index: 3, kind: input, shape index: {}]
  %s4 = inlined_call_operand.vmem [shape: f32[1,256], index: 4, kind: input, shape index: {}]
  %s5 = inlined_call_operand.vmem [shape: bf16[3,256,256], index: 5, kind: input, shape index: {}]
  %s6 = inlined_call_operand.vmem [shape: f32[1,256], index: 6, kind: input, shape index: {}]
  %s7 = inlined_call_operand.vmem [shape: f32[1,256], index: 7, kind: input, shape index: {}]
  %s8 = inlined_call_operand.vmem [shape: f32[1,256], index: 8, kind: input, shape index: {}]
  %s9 = inlined_call_operand.hbm [shape: bf16[256,256], index: 9, kind: input, shape index: {}]
  %s10 = inlined_call_operand.vmem [shape: f32[2,16,256], index: 10, kind: output, shape index: {}]
  %s11 = sld [smem:[#allocation0]]
  $region58: #{encoder_decoder_block.1} parent=0
    _
  %s13 = ssub.s32 1, %s11
  %s14 = scalar_select 0, %s13, %s11
  $region1: #{encoder_decoder_block.1} parent=0
    #allocation2 [shape = 'u8[196608]{0}', space=vmem, size = 0x30000, scoped, tag = 'input window, operand 1, single buffered']
    #allocation3 [shape = 's32[1]{0}', space=sflag, size = 0x4, scoped, tag = 'scoped memory for encoder_decoder_block.1']
    #allocation4 [shape = 'u8[131072]{0}', space=vmem, size = 0x20000, scoped, tag = 'input window, operand 9, single buffered']
    #allocation5 [shape = 's32[1]{0}', space=sflag, size = 0x4, scoped, tag = 'scoped memory for encoder_decoder_block.1']
    %15 = vsyncpa [#allocation3], 0
    %16 = vsyncpa [#allocation5], 0
    // Predicated region
    $region2: #{encoder_decoder_block.1} parent=1 // pred_check
      _
    $region3: #{encoder_decoder_block.1} parent=1 // pred_check_branch
      %18 = sbr.rel (0) target = $region5
    $region4: #{encoder_decoder_block.1} parent=1 // pred_region
      _
    $region5: #{encoder_decoder_block.1} parent=1 // pred_fallthru
      _
    // Predicated region
    $region6: #{encoder_decoder_block.1} parent=1 // pred_check
      _
    $region7: #{encoder_decoder_block.1} parent=1 // pred_check_branch
      %20 = sbr.rel (0) target = $region9
    $region8: #{encoder_decoder_block.1} parent=1 // pred_region
      %s22 = ssub.s32 6144, 6144
      %23 = vsyncadd [#allocation3], %s22
      %s24 = sshll.u32 [#allocation2], 4
      %s25 = int_to_ptr.vmem [resolvable:$true] %s24
      %30 = dma.hbm_to_vmem [thread:$0]  %s1, 6144, %s25, [#allocation3], 128, 128, 8
    $region9: #{encoder_decoder_block.1} parent=1 // pred_fallthru
      _
    // Predicated region
    $region10: #{encoder_decoder_block.1} parent=1 // pred_check
      _
    $region11: #{encoder_decoder_block.1} parent=1 // pred_check_branch
      %32 = sbr.rel (0) target = $region13
    $region12: #{encoder_decoder_block.1} parent=1 // pred_region
      _
    $region13: #{encoder_decoder_block.1} parent=1 // pred_fallthru
      _
    // Predicated region
    $region14: #{encoder_decoder_block.1} parent=1 // pred_check
      _
    $region15: #{encoder_decoder_block.1} parent=1 // pred_check_branch
      %34 = sbr.rel (0) target = $region17
    $region16: #{encoder_decoder_block.1} parent=1 // pred_region
      _
    $region17: #{encoder_decoder_block.1} parent=1 // pred_fallthru
      _
    // Predicated region
    $region18: #{encoder_decoder_block.1} parent=1 // pred_check
      _
    $region19: #{encoder_decoder_block.1} parent=1 // pred_check_branch
      %36 = sbr.rel (0) target = $region21
    $region20: #{encoder_decoder_block.1} parent=1 // pred_region
      _
    $region21: #{encoder_decoder_block.1} parent=1 // pred_fallthru
      _
    // Predicated region
    $region22: #{encoder_decoder_block.1} parent=1 // pred_check
      _
    $region23: #{encoder_decoder_block.1} parent=1 // pred_check_branch
      %38 = sbr.rel (0) target = $region25
    $region24: #{encoder_decoder_block.1} parent=1 // pred_region
      _
    $region25: #{encoder_decoder_block.1} parent=1 // pred_fallthru
      _
    // Predicated region
    $region26: #{encoder_decoder_block.1} parent=1 // pred_check
      _
    $region27: #{encoder_decoder_block.1} parent=1 // pred_check_branch
      %40 = sbr.rel (0) target = $region29
    $region28: #{encoder_decoder_block.1} parent=1 // pred_region
      _
    $region29: #{encoder_decoder_block.1} parent=1 // pred_fallthru
      _
    // Predicated region
    $region30: #{encoder_decoder_block.1} parent=1 // pred_check
      _
    $region31: #{encoder_decoder_block.1} parent=1 // pred_check_branch
      %42 = sbr.rel (0) target = $region33
    $region32: #{encoder_decoder_block.1} parent=1 // pred_region
      _
    $region33: #{encoder_decoder_block.1} parent=1 // pred_fallthru
      _
    // Predicated region
    $region34: #{encoder_decoder_block.1} parent=1 // pred_check
      _
    $region35: #{encoder_decoder_block.1} parent=1 // pred_check_branch
      %44 = sbr.rel (0) target = $region37
    $region36: #{encoder_decoder_block.1} parent=1 // pred_region
      _
    $region37: #{encoder_decoder_block.1} parent=1 // pred_fallthru
      _
    // Predicated region
    $region38: #{encoder_decoder_block.1} parent=1 // pred_check
      _
    $region39: #{encoder_decoder_block.1} parent=1 // pred_check_branch
      %46 = sbr.rel (0) target = $region41
    $region40: #{encoder_decoder_block.1} parent=1 // pred_region
      %s48 = ssub.s32 4096, 4096
      %49 = vsyncadd [#allocation5], %s48
      %s50 = sshll.u32 [#allocation4], 4
      %s51 = int_to_ptr.vmem [resolvable:$true] %s50
      %56 = dma.hbm_to_vmem [thread:$0]  %s9, 4096, %s51, [#allocation5], 128, 128, 8
    $region41: #{encoder_decoder_block.1} parent=1 // pred_fallthru
      _
    // Predicated region
    $region42: #{encoder_decoder_block.1} parent=1 // pred_check
      _
    $region43: #{encoder_decoder_block.1} parent=1 // pred_check_branch
      %58 = sbr.rel (0) target = $region45
    $region44: #{encoder_decoder_block.1} parent=1 // pred_region
      %59 = dma.done [#allocation3], 6144
    $region45: #{encoder_decoder_block.1} parent=1 // pred_fallthru
      _
    // Predicated region
    $region46: #{encoder_decoder_block.1} parent=1 // pred_check
      _
    $region47: #{encoder_decoder_block.1} parent=1 // pred_check_branch
      %61 = sbr.rel (0) target = $region49
    $region48: #{encoder_decoder_block.1} parent=1 // pred_region
      %62 = dma.done [#allocation5], 4096
    $region49: #{encoder_decoder_block.1} parent=1 // pred_fallthru
      _
    %v63 = vlaneseq
    %v64 = vshrl.u32 %v63, 7
    %v65 = vadd.s32 %v64, 8
    %v66 = vadd.s32 %v64, 16
    %v67 = vadd.s32 %v64, 24
    %v68 = vlaneseq
    %v69 = vand.u32 %v68, 127
    %v70 = vsub.s32 %v64, 1
    %v71 = vsub.s32 %v65, 1
    %v72 = vsub.s32 %v66, 1
    %v73 = vsub.s32 %v67, 1
    %vm74 = vcmp.eq.s32.totalorder %v69, %v70
    %vm75 = vcmp.eq.s32.totalorder %v69, %v71
    %vm76 = vcmp.eq.s32.totalorder %v69, %v72
    %vm77 = vcmp.eq.s32.totalorder %v69, %v73
    %vm78 = vcmp.lt.s32.totalorder %v64, 0
    %v79 = vsub.s32 0, %v64
    %v80 = vsel %vm78, %v79, %v64
    %v81 = vshrl.u32 %v80, 4
    %v82 = vand.u32 %v80, 15
    %v83 = vsub.s32 0, %v82
    %v84 = vsel %vm78, %v83, %v82
    %vm85 = vcmp.lt.s32.totalorder %v65, 0
    %v86 = vsub.s32 0, %v65
    %v87 = vsel %vm85, %v86, %v65
    %v88 = vshrl.u32 %v87, 4
    %v89 = vand.u32 %v87, 15
    %v90 = vsub.s32 0, %v89
    %v91 = vsel %vm85, %v90, %v89
    %vm92 = vcmp.lt.s32.totalorder %v66, 0
    %v93 = vsub.s32 0, %v66
    %v94 = vsel %vm92, %v93, %v66
    %v95 = vshrl.u32 %v94, 4
    %v96 = vand.u32 %v94, 15
    %v97 = vsub.s32 0, %v96
    %v98 = vsel %vm92, %v97, %v96
    %vm99 = vcmp.lt.s32.totalorder %v67, 0
    %v100 = vsub.s32 0, %v67
    %v101 = vsel %vm99, %v100, %v67
    %v102 = vshrl.u32 %v101, 4
    %v103 = vand.u32 %v101, 15
    %v104 = vsub.s32 0, %v103
    %v105 = vsel %vm99, %v104, %v103
    %vm106 = vcmp.ne.s32.totalorder %v84, 0
    %vm107 = vcmp.ne.s32.totalorder %v91, 0
    %vm108 = vcmp.ne.s32.totalorder %v98, 0
    %vm109 = vcmp.ne.s32.totalorder %v105, 0
    %vm110 = vcmp.lt.s32.totalorder %v84, 0
    %vm111 = vcmp.lt.s32.totalorder %v91, 0
    %vm112 = vcmp.lt.s32.totalorder %v98, 0
    %vm113 = vcmp.lt.s32.totalorder %v105, 0
    %vm114 = vmand %vm110, %vm106
    %vm115 = vmand %vm111, %vm107
    %vm116 = vmand %vm112, %vm108
    %vm117 = vmand %vm113, %vm109
    %v118 = vadd.s32 %v84, 16
    %v119 = vadd.s32 %v91, 16
    %v120 = vadd.s32 %v98, 16
    %v121 = vadd.s32 %v105, 16
    %v122 = vsel %vm114, %v118, %v84
    %v123 = vsel %vm115, %v119, %v91
    %v124 = vsel %vm116, %v120, %v98
    %v125 = vsel %vm117, %v121, %v105
    %vm126 = vcmp.ne.s32.totalorder %v122, 0
    %vm127 = vcmp.ne.s32.totalorder %v123, 0
    %vm128 = vcmp.ne.s32.totalorder %v124, 0
    %vm129 = vcmp.ne.s32.totalorder %v125, 0
    %vm130 = vmand %vm74, %vm126
    %vm131 = vmand %vm75, %vm127
    %vm132 = vmand %vm76, %vm128
    %vm133 = vmand %vm77, %vm129
    %v134 = vsel %vm130, 1.0, 0.0
    %v135 = vsel %vm131, 1.0, 0.0
    %v136 = vsel %vm132, 1.0, 0.0
    %v137 = vsel %vm133, 1.0, 0.0
    %v138 = vadd.s32 %v64, 1
    %v139 = vadd.s32 %v65, 1
    %v140 = vadd.s32 %v66, 1
    %v141 = vadd.s32 %v67, 1
    %vm142 = vcmp.eq.s32.totalorder %v69, %v138
    %vm143 = vcmp.eq.s32.totalorder %v69, %v139
    %vm144 = vcmp.eq.s32.totalorder %v69, %v140
    %vm145 = vcmp.eq.s32.totalorder %v69, %v141
    %vm146 = vcmp.ne.s32.totalorder %v122, 15
    %vm147 = vcmp.ne.s32.totalorder %v123, 15
    %vm148 = vcmp.ne.s32.totalorder %v124, 15
    %vm149 = vcmp.ne.s32.totalorder %v125, 15
    %vm150 = vmand %vm142, %vm146
    %vm151 = vmand %vm143, %vm147
    %vm152 = vmand %vm144, %vm148
    %vm153 = vmand %vm145, %vm149
    %v154 = vsel %vm150, 1.0, 0.0
    %v155 = vsel %vm151, 1.0, 0.0
    %v156 = vsel %vm152, 1.0, 0.0
    %v157 = vsel %vm153, 1.0, 0.0
    %v158 = vld [vmem:[#allocation4] sm:$0xff]
    %v159 = vld [vmem:[#allocation4 + $0x8] sm:$0xff]
    %v160 = vld [vmem:[#allocation4 + $0x10] sm:$0xff]
    %v161 = vld [vmem:[#allocation4 + $0x18] sm:$0xff]
    %v162 = vld [vmem:[#allocation4 + $0x20] sm:$0xff]
    %v163 = vld [vmem:[#allocation4 + $0x28] sm:$0xff]
    %v164 = vld [vmem:[#allocation4 + $0x30] sm:$0xff]
    %v165 = vld [vmem:[#allocation4 + $0x38] sm:$0xff]
    %v166 = vld [vmem:[#allocation4 + $0x40] sm:$0xff]
    %v167 = vld [vmem:[#allocation4 + $0x48] sm:$0xff]
    %v168 = vld [vmem:[#allocation4 + $0x50] sm:$0xff]
    %v169 = vld [vmem:[#allocation4 + $0x58] sm:$0xff]
    %v170 = vld [vmem:[#allocation4 + $0x60] sm:$0xff]
    %v171 = vld [vmem:[#allocation4 + $0x68] sm:$0xff]
    %v172 = vld [vmem:[#allocation4 + $0x70] sm:$0xff]
    %v173 = vld [vmem:[#allocation4 + $0x78] sm:$0xff]
    %v174 = vld [vmem:[#allocation4 + $0x80] sm:$0xff]
    %v175 = vld [vmem:[#allocation4 + $0x88] sm:$0xff]
    %v176 = vld [vmem:[#allocation4 + $0x90] sm:$0xff]
    %v177 = vld [vmem:[#allocation4 + $0x98] sm:$0xff]
    %v178 = vld [vmem:[#allocation4 + $0xa0] sm:$0xff]
    %v179 = vld [vmem:[#allocation4 + $0xa8] sm:$0xff]
    %v180 = vld [vmem:[#allocation4 + $0xb0] sm:$0xff]
    %v181 = vld [vmem:[#allocation4 + $0xb8] sm:$0xff]
    %v182 = vld [vmem:[#allocation4 + $0xc0] sm:$0xff]
    %v183 = vld [vmem:[#allocation4 + $0xc8] sm:$0xff]
    %v184 = vld [vmem:[#allocation4 + $0xd0] sm:$0xff]
    %v185 = vld [vmem:[#allocation4 + $0xd8] sm:$0xff]
    %v186 = vld [vmem:[#allocation4 + $0xe0] sm:$0xff]
    %v187 = vld [vmem:[#allocation4 + $0xe8] sm:$0xff]
    %v188 = vld [vmem:[#allocation4 + $0xf0] sm:$0xff]
    %v189 = vld [vmem:[#allocation4 + $0xf8] sm:$0xff]
    %v190 = vunpack.c.l.bf16 %v158
    %v191 = vunpack.c.h.bf16 %v158
    %v192 = vunpack.c.l.bf16 %v159
    %v193 = vunpack.c.h.bf16 %v159
    %v194 = vunpack.c.l.bf16 %v160
    %v195 = vunpack.c.h.bf16 %v160
    %v196 = vunpack.c.l.bf16 %v161
    %v197 = vunpack.c.h.bf16 %v161
    %v198 = vunpack.c.l.bf16 %v162
    %v199 = vunpack.c.h.bf16 %v162
    %v200 = vunpack.c.l.bf16 %v163
    %v201 = vunpack.c.h.bf16 %v163
    %v202 = vunpack.c.l.bf16 %v164
    %v203 = vunpack.c.h.bf16 %v164
    %v204 = vunpack.c.l.bf16 %v165
    %v205 = vunpack.c.h.bf16 %v165
    %v206 = vunpack.c.l.bf16 %v166
    %v207 = vunpack.c.h.bf16 %v166
    %v208 = vunpack.c.l.bf16 %v167
    %v209 = vunpack.c.h.bf16 %v167
    %v210 = vunpack.c.l.bf16 %v168
    %v211 = vunpack.c.h.bf16 %v168
    %v212 = vunpack.c.l.bf16 %v169
    %v213 = vunpack.c.h.bf16 %v169
    %v214 = vunpack.c.l.bf16 %v170
    %v215 = vunpack.c.h.bf16 %v170
    %v216 = vunpack.c.l.bf16 %v171
    %v217 = vunpack.c.h.bf16 %v171
    %v218 = vunpack.c.l.bf16 %v172
    %v219 = vunpack.c.h.bf16 %v172
    %v220 = vunpack.c.l.bf16 %v173
    %v221 = vunpack.c.h.bf16 %v173
    %v222 = vunpack.c.l.bf16 %v174
    %v223 = vunpack.c.h.bf16 %v174
    %v224 = vunpack.c.l.bf16 %v175
    %v225 = vunpack.c.h.bf16 %v175
    %v226 = vunpack.c.l.bf16 %v176
    %v227 = vunpack.c.h.bf16 %v176
    %v228 = vunpack.c.l.bf16 %v177
    %v229 = vunpack.c.h.bf16 %v177
    %v230 = vunpack.c.l.bf16 %v178
    %v231 = vunpack.c.h.bf16 %v178
    %v232 = vunpack.c.l.bf16 %v179
    %v233 = vunpack.c.h.bf16 %v179
    %v234 = vunpack.c.l.bf16 %v180
    %v235 = vunpack.c.h.bf16 %v180
    %v236 = vunpack.c.l.bf16 %v181
    %v237 = vunpack.c.h.bf16 %v181
    %v238 = vunpack.c.l.bf16 %v182
    %v239 = vunpack.c.h.bf16 %v182
    %v240 = vunpack.c.l.bf16 %v183
    %v241 = vunpack.c.h.bf16 %v183
    %v242 = vunpack.c.l.bf16 %v184
    %v243 = vunpack.c.h.bf16 %v184
    %v244 = vunpack.c.l.bf16 %v185
    %v245 = vunpack.c.h.bf16 %v185
    %v246 = vunpack.c.l.bf16 %v186
    %v247 = vunpack.c.h.bf16 %v186
    %v248 = vunpack.c.l.bf16 %v187
    %v249 = vunpack.c.h.bf16 %v187
    %v250 = vunpack.c.l.bf16 %v188
    %v251 = vunpack.c.h.bf16 %v188
    %v252 = vunpack.c.l.bf16 %v189
    %v253 = vunpack.c.h.bf16 %v189
    %v254 = vld [vmem:[%s0] sm:$0xff]
    %v255 = vld [vmem:[%s0 + $0x8] sm:$0xff]
    %v256 = vld [vmem:[%s0 + $0x10] sm:$0xff]
    %v257 = vld [vmem:[%s0 + $0x18] sm:$0xff]
    %v258 = vld [vmem:[%s2] sm:$0x3]
    %vm259 = vcmask 261120
    %v261 = vsel %vm259, %v134, 0
    %v264 = vsel %vm259, %v135, 0
    %v267 = vsel %vm259, %v136, 0
    %v270 = vsel %vm259, %v137, 0
    %272 = vmatprep.subr.mxu0 0.0
    %273 = vmatpush1.msra.mxu0 %v254
    %274 = vmatprep.subr.mxu0 0.0
    %275 = vmatpush1.msra.mxu0 %v255
    %276 = vmatprep.subr.mxu0 0.0
    %277 = vmatpush1.msra.mxu0 %v256
    %278 = vmatprep.subr.mxu0 0.0
    %279 = vmatpush1.msra.mxu0 %v257
    %280 = vmatprep.subr.mxu0 0.0
    %281 = vmatpush1.msra.mxu0 0.0
    %282 = vmatprep.subr.mxu0 0.0
    %283 = vmatpush1.msra.mxu0 0.0
    %284 = vmatprep.subr.mxu0 0.0
    %285 = vmatpush1.msra.mxu0 0.0
    %286 = vmatprep.subr.mxu0 0.0
    %287 = vmatpush1.msra.mxu0 0.0
    %288 = vmatprep.subr.mxu0 0.0
    %289 = vmatpush1.msra.mxu0 0.0
    %290 = vmatprep.subr.mxu0 0.0
    %291 = vmatpush1.msra.mxu0 0.0
    %292 = vmatprep.subr.mxu0 0.0
    %293 = vmatpush1.msra.mxu0 0.0
    %294 = vmatprep.subr.mxu0 0.0
    %295 = vmatpush1.msra.mxu0 0.0
    %296 = vmatprep.subr.mxu0 0.0
    %297 = vmatpush1.msra.mxu0 0.0
    %298 = vmatprep.subr.mxu0 0.0
    %299 = vmatpush1.msra.mxu0 0.0
    %300 = vmatprep.subr.mxu0 0.0
    %301 = vmatpush1.msra.mxu0 0.0
    %302 = vmatprep.subr.mxu0 0.0
    %303 = vmatpush1.msra.mxu0 0.0
    %304 = vmatprep.subr.mxu0 0.0
    %305 = vmatpush1.msra.mxu0 0.0
    %306 = vmatprep.subr.mxu0 0.0
    %307 = vmatpush1.msra.mxu0 0.0
    %308 = vmatprep.subr.mxu0 0.0
    %309 = vmatpush1.msra.mxu0 0.0
    %310 = vmatprep.subr.mxu0 0.0
    %311 = vmatpush1.msra.mxu0 0.0
    %312 = vmatprep.subr.mxu0 0.0
    %313 = vmatpush1.msra.mxu0 0.0
    %314 = vmatprep.subr.mxu0 0.0
    %315 = vmatpush1.msra.mxu0 0.0
    %316 = vmatprep.subr.mxu0 0.0
    %317 = vmatpush1.msra.mxu0 0.0
    %318 = vmatprep.subr.mxu0 0.0
    %319 = vmatpush1.msra.mxu0 0.0
    %320 = vmatprep.subr.mxu0 0.0
    %321 = vmatpush1.msra.mxu0 0.0
    %322 = vmatprep.subr.mxu0 0.0
    %323 = vmatpush1.msra.mxu0 0.0
    %324 = vmatprep.subr.mxu0 0.0
    %325 = vmatpush1.msra.mxu0 0.0
    %326 = vmatprep.subr.mxu0 0.0
    %327 = vmatpush1.msra.mxu0 0.0
    %328 = vmatprep.subr.mxu0 0.0
    %329 = vmatpush1.msra.mxu0 0.0
    %330 = vmatprep.subr.mxu0 0.0
    %331 = vmatpush1.msra.mxu0 0.0
    %332 = vmatprep.subr.mxu0 0.0
    %333 = vmatpush1.msra.mxu0 0.0
    %334 = vmatprep.subr.mxu0 0.0
    %335 = vmatpush1.msra.mxu0 0.0
    %336 = vmatprep.mubr.f32.mxu0 0.0
    %337 = vmatmul.mubr.f32.gmra.mrb[0].mxu0 %v261
    %v338 = vpop.f32.mrb[0].mxu0
    %v339 = vadd.f32 0.0, %v338
    %v340 = vpop.f32.mrb[0].mxu0
    %341 = vmatprep.mubr.f32.mxu0 0.0
    %342 = vmatmul.mubr.f32.gmra.mrb[0].mxu0 %v264
    %v343 = vpop.f32.mrb[0].mxu0
    %v344 = vadd.f32 0.0, %v343
    %v345 = vpop.f32.mrb[0].mxu0
    %346 = vmatprep.mubr.f32.mxu0 0.0
    %347 = vmatmul.mubr.f32.gmra.mrb[0].mxu0 %v267
    %v348 = vpop.f32.mrb[0].mxu0
    %v349 = vadd.f32 0.0, %v348
    %v350 = vpop.f32.mrb[0].mxu0
    %351 = vmatprep.mubr.f32.mxu0 0.0
    %352 = vmatmul.mubr.f32.gmra.mrb[0].mxu0 %v270
    %v353 = vpop.f32.mrb[0].mxu0
    %v354 = vadd.f32 0.0, %v353
    %v355 = vpop.f32.mrb[0].mxu0
    %356 = vdwg.mxu0
    %v358 = vsel %vm259, %v154, 0
    %v361 = vsel %vm259, %v155, 0
    %v364 = vsel %vm259, %v156, 0
    %v367 = vsel %vm259, %v157, 0
    %369 = vmatprep.subr.mxu0 0.0
    %370 = vmatpush1.msra.mxu0 %v254
    %371 = vmatprep.subr.mxu0 0.0
    %372 = vmatpush1.msra.mxu0 %v255
    %373 = vmatprep.subr.mxu0 0.0
    %374 = vmatpush1.msra.mxu0 %v256
    %375 = vmatprep.subr.mxu0 0.0
    %376 = vmatpush1.msra.mxu0 %v257
    %377 = vmatprep.subr.mxu0 0.0
    %378 = vmatpush1.msra.mxu0 0.0
    %379 = vmatprep.subr.mxu0 0.0
    %380 = vmatpush1.msra.mxu0 0.0
    %381 = vmatprep.subr.mxu0 0.0
    %382 = vmatpush1.msra.mxu0 0.0
    %383 = vmatprep.subr.mxu0 0.0
    %384 = vmatpush1.msra.mxu0 0.0
    %385 = vmatprep.subr.mxu0 0.0
    %386 = vmatpush1.msra.mxu0 0.0
    %387 = vmatprep.subr.mxu0 0.0
    %388 = vmatpush1.msra.mxu0 0.0
    %389 = vmatprep.subr.mxu0 0.0
    %390 = vmatpush1.msra.mxu0 0.0
    %391 = vmatprep.subr.mxu0 0.0
    %392 = vmatpush1.msra.mxu0 0.0
    %393 = vmatprep.subr.mxu0 0.0
    %394 = vmatpush1.msra.mxu0 0.0
    %395 = vmatprep.subr.mxu0 0.0
    %396 = vmatpush1.msra.mxu0 0.0
    %397 = vmatprep.subr.mxu0 0.0
    %398 = vmatpush1.msra.mxu0 0.0
    %399 = vmatprep.subr.mxu0 0.0
    %400 = vmatpush1.msra.mxu0 0.0
    %401 = vmatprep.subr.mxu0 0.0
    %402 = vmatpush1.msra.mxu0 0.0
    %403 = vmatprep.subr.mxu0 0.0
    %404 = vmatpush1.msra.mxu0 0.0
    %405 = vmatprep.subr.mxu0 0.0
    %406 = vmatpush1.msra.mxu0 0.0
    %407 = vmatprep.subr.mxu0 0.0
    %408 = vmatpush1.msra.mxu0 0.0
    %409 = vmatprep.subr.mxu0 0.0
    %410 = vmatpush1.msra.mxu0 0.0
    %411 = vmatprep.subr.mxu0 0.0
    %412 = vmatpush1.msra.mxu0 0.0
    %413 = vmatprep.subr.mxu0 0.0
    %414 = vmatpush1.msra.mxu0 0.0
    %415 = vmatprep.subr.mxu0 0.0
    %416 = vmatpush1.msra.mxu0 0.0
    %417 = vmatprep.subr.mxu0 0.0
    %418 = vmatpush1.msra.mxu0 0.0
    %419 = vmatprep.subr.mxu0 0.0
    %420 = vmatpush1.msra.mxu0 0.0
    %421 = vmatprep.subr.mxu0 0.0
    %422 = vmatpush1.msra.mxu0 0.0
    %423 = vmatprep.subr.mxu0 0.0
    %424 = vmatpush1.msra.mxu0 0.0
    %425 = vmatprep.subr.mxu0 0.0
    %426 = vmatpush1.msra.mxu0 0.0
    %427 = vmatprep.subr.mxu0 0.0
    %428 = vmatpush1.msra.mxu0 0.0
    %429 = vmatprep.subr.mxu0 0.0
    %430 = vmatpush1.msra.mxu0 0.0
    %431 = vmatprep.subr.mxu0 0.0
    %432 = vmatpush1.msra.mxu0 0.0
    %433 = vmatprep.mubr.f32.mxu0 0.0
    %434 = vmatmul.mubr.f32.gmra.mrb[0].mxu0 %v358
    %v435 = vpop.f32.mrb[0].mxu0
    %v436 = vadd.f32 0.0, %v435
    %v437 = vpop.f32.mrb[0].mxu0
    %438 = vmatprep.mubr.f32.mxu0 0.0
    %439 = vmatmul.mubr.f32.gmra.mrb[0].mxu0 %v361
    %v440 = vpop.f32.mrb[0].mxu0
    %v441 = vadd.f32 0.0, %v440
    %v442 = vpop.f32.mrb[0].mxu0
    %443 = vmatprep.mubr.f32.mxu0 0.0
    %444 = vmatmul.mubr.f32.gmra.mrb[0].mxu0 %v364
    %v445 = vpop.f32.mrb[0].mxu0
    %v446 = vadd.f32 0.0, %v445
    %v447 = vpop.f32.mrb[0].mxu0
    %448 = vmatprep.mubr.f32.mxu0 0.0
    %449 = vmatmul.mubr.f32.gmra.mrb[0].mxu0 %v367
    %v450 = vpop.f32.mrb[0].mxu0
    %v451 = vadd.f32 0.0, %v450
    %v452 = vpop.f32.mrb[0].mxu0
    %453 = vdwg.mxu0
    %v454 = vld [vmem:[#allocation2] sm:$0xff]
    %v455 = vld [vmem:[#allocation2 + $0x8] sm:$0xff]
    %v456 = vld [vmem:[#allocation2 + $0x10] sm:$0xff]
    %v457 = vld [vmem:[#allocation2 + $0x18] sm:$0xff]
    %v458 = vld [vmem:[#allocation2 + $0x20] sm:$0xff]
    %v459 = vld [vmem:[#allocation2 + $0x28] sm:$0xff]
    %v460 = vld [vmem:[#allocation2 + $0x30] sm:$0xff]
    %v461 = vld [vmem:[#allocation2 + $0x38] sm:$0xff]
    %v462 = vld [vmem:[#allocation2 + $0x40] sm:$0xff]
    %v463 = vld [vmem:[#allocation2 + $0x48] sm:$0xff]
    %v464 = vld [vmem:[#allocation2 + $0x50] sm:$0xff]
    %v465 = vld [vmem:[#allocation2 + $0x58] sm:$0xff]
    %v466 = vld [vmem:[#allocation2 + $0x60] sm:$0xff]
    %v467 = vld [vmem:[#allocation2 + $0x68] sm:$0xff]
    %v468 = vld [vmem:[#allocation2 + $0x70] sm:$0xff]
    %v469 = vld [vmem:[#allocation2 + $0x78] sm:$0xff]
    %v470 = vunpack.c.l.bf16 %v454
    %v471 = vunpack.c.h.bf16 %v454
    %v472 = vunpack.c.l.bf16 %v455
    %v473 = vunpack.c.h.bf16 %v455
    %v474 = vunpack.c.l.bf16 %v456
    %v475 = vunpack.c.h.bf16 %v456
    %v476 = vunpack.c.l.bf16 %v457
    %v477 = vunpack.c.h.bf16 %v457
    %v478 = vunpack.c.l.bf16 %v458
    %v479 = vunpack.c.h.bf16 %v458
    %v480 = vunpack.c.l.bf16 %v459
    %v481 = vunpack.c.h.bf16 %v459
    %v482 = vunpack.c.l.bf16 %v460
    %v483 = vunpack.c.h.bf16 %v460
    %v484 = vunpack.c.l.bf16 %v461
    %v485 = vunpack.c.h.bf16 %v461
    %v486 = vunpack.c.l.bf16 %v462
    %v487 = vunpack.c.h.bf16 %v462
    %v488 = vunpack.c.l.bf16 %v463
    %v489 = vunpack.c.h.bf16 %v463
    %v490 = vunpack.c.l.bf16 %v464
    %v491 = vunpack.c.h.bf16 %v464
    %v492 = vunpack.c.l.bf16 %v465
    %v493 = vunpack.c.h.bf16 %v465
    %v494 = vunpack.c.l.bf16 %v466
    %v495 = vunpack.c.h.bf16 %v466
    %v496 = vunpack.c.l.bf16 %v467
    %v497 = vunpack.c.h.bf16 %v467
    %v498 = vunpack.c.l.bf16 %v468
    %v499 = vunpack.c.h.bf16 %v468
    %v500 = vunpack.c.l.bf16 %v469
    %v501 = vunpack.c.h.bf16 %v469
    %s502 = scalar_lea.vmem [#allocation2], 128
    %v503 = vld [vmem:[%s502] sm:$0xff]
    %v504 = vld [vmem:[%s502 + $0x8] sm:$0xff]
    %v505 = vld [vmem:[%s502 + $0x10] sm:$0xff]
    %v506 = vld [vmem:[%s502 + $0x18] sm:$0xff]
    %v507 = vld [vmem:[%s502 + $0x20] sm:$0xff]
    %v508 = vld [vmem:[%s502 + $0x28] sm:$0xff]
    %v509 = vld [vmem:[%s502 + $0x30] sm:$0xff]
    %v510 = vld [vmem:[%s502 + $0x38] sm:$0xff]
    %v511 = vld [vmem:[%s502 + $0x40] sm:$0xff]
    %v512 = vld [vmem:[%s502 + $0x48] sm:$0xff]
    %v513 = vld [vmem:[%s502 + $0x50] sm:$0xff]
    %v514 = vld [vmem:[%s502 + $0x58] sm:$0xff]
    %v515 = vld [vmem:[%s502 + $0x60] sm:$0xff]
    %v516 = vld [vmem:[%s502 + $0x68] sm:$0xff]
    %v517 = vld [vmem:[%s502 + $0x70] sm:$0xff]
    %v518 = vld [vmem:[%s502 + $0x78] sm:$0xff]
    %v519 = vunpack.c.l.bf16 %v503
    %v520 = vunpack.c.h.bf16 %v503
    %v521 = vunpack.c.l.bf16 %v504
    %v522 = vunpack.c.h.bf16 %v504
    %v523 = vunpack.c.l.bf16 %v505
    %v524 = vunpack.c.h.bf16 %v505
    %v525 = vunpack.c.l.bf16 %v506
    %v526 = vunpack.c.h.bf16 %v506
    %v527 = vunpack.c.l.bf16 %v507
    %v528 = vunpack.c.h.bf16 %v507
    %v529 = vunpack.c.l.bf16 %v508
    %v530 = vunpack.c.h.bf16 %v508
    %v531 = vunpack.c.l.bf16 %v509
    %v532 = vunpack.c.h.bf16 %v509
    %v533 = vunpack.c.l.bf16 %v510
    %v534 = vunpack.c.h.bf16 %v510
    %v535 = vunpack.c.l.bf16 %v511
    %v536 = vunpack.c.h.bf16 %v511
    %v537 = vunpack.c.l.bf16 %v512
    %v538 = vunpack.c.h.bf16 %v512
    %v539 = vunpack.c.l.bf16 %v513
    %v540 = vunpack.c.h.bf16 %v513
    %v541 = vunpack.c.l.bf16 %v514
    %v542 = vunpack.c.h.bf16 %v514
    %v543 = vunpack.c.l.bf16 %v515
    %v544 = vunpack.c.h.bf16 %v515
    %v545 = vunpack.c.l.bf16 %v516
    %v546 = vunpack.c.h.bf16 %v516
    %v547 = vunpack.c.l.bf16 %v517
    %v548 = vunpack.c.h.bf16 %v517
    %v549 = vunpack.c.l.bf16 %v518
    %v550 = vunpack.c.h.bf16 %v518
    %551 = vmatprep.subr.mxu0 %v520
    %552 = vmatpush1.msra.mxu0 %v519
    %553 = vmatprep.subr.mxu0 %v522
    %554 = vmatpush1.msra.mxu0 %v521
    %555 = vmatprep.subr.mxu0 %v524
    %556 = vmatpush1.msra.mxu0 %v523
    %557 = vmatprep.subr.mxu0 %v526
    %558 = vmatpush1.msra.mxu0 %v525
    %559 = vmatprep.subr.mxu0 %v528
    %560 = vmatpush1.msra.mxu0 %v527
    %561 = vmatprep.subr.mxu0 %v530
    %562 = vmatpush1.msra.mxu0 %v529
    %563 = vmatprep.subr.mxu0 %v532
    %564 = vmatpush1.msra.mxu0 %v531
    %565 = vmatprep.subr.mxu0 %v534
    %566 = vmatpush1.msra.mxu0 %v533
    %567 = vmatprep.subr.mxu0 %v536
    %568 = vmatpush1.msra.mxu0 %v535
    %569 = vmatprep.subr.mxu0 %v538
    %570 = vmatpush1.msra.mxu0 %v537
    %571 = vmatprep.subr.mxu0 %v540
    %572 = vmatpush1.msra.mxu0 %v539
    %573 = vmatprep.subr.mxu0 %v542
    %574 = vmatpush1.msra.mxu0 %v541
    %575 = vmatprep.subr.mxu0 %v544
    %576 = vmatpush1.msra.mxu0 %v543
    %577 = vmatprep.subr.mxu0 %v546
    %578 = vmatpush1.msra.mxu0 %v545
    %579 = vmatprep.subr.mxu0 %v548
    %580 = vmatpush1.msra.mxu0 %v547
    %581 = vmatprep.subr.mxu0 %v550
    %582 = vmatpush1.msra.mxu0 %v549
    %583 = vmatprep.subr.mxu0 0.0
    %584 = vmatpush1.msra.mxu0 0.0
    %585 = vmatprep.subr.mxu0 0.0
    %586 = vmatpush1.msra.mxu0 0.0
    %587 = vmatprep.subr.mxu0 0.0
    %588 = vmatpush1.msra.mxu0 0.0
    %589 = vmatprep.subr.mxu0 0.0
    %590 = vmatpush1.msra.mxu0 0.0
    %591 = vmatprep.subr.mxu0 0.0
    %592 = vmatpush1.msra.mxu0 0.0
    %593 = vmatprep.subr.mxu0 0.0
    %594 = vmatpush1.msra.mxu0 0.0
    %595 = vmatprep.subr.mxu0 0.0
    %596 = vmatpush1.msra.mxu0 0.0
    %597 = vmatprep.subr.mxu0 0.0
    %598 = vmatpush1.msra.mxu0 0.0
    %599 = vmatprep.subr.mxu0 0.0
    %600 = vmatpush1.msra.mxu0 0.0
    %601 = vmatprep.subr.mxu0 0.0
    %602 = vmatpush1.msra.mxu0 0.0
    %603 = vmatprep.subr.mxu0 0.0
    %604 = vmatpush1.msra.mxu0 0.0
    %605 = vmatprep.subr.mxu0 0.0
    %606 = vmatpush1.msra.mxu0 0.0
    %607 = vmatprep.subr.mxu0 0.0
    %608 = vmatpush1.msra.mxu0 0.0
    %609 = vmatprep.subr.mxu0 0.0
    %610 = vmatpush1.msra.mxu0 0.0
    %611 = vmatprep.subr.mxu0 0.0
    %612 = vmatpush1.msra.mxu0 0.0
    %613 = vmatprep.subr.mxu0 0.0
    %614 = vmatpush1.msra.mxu0 0.0
    %615 = vmatprep.mubr.f32.mxu0 0.0
    %616 = vmatmul.mubr.f32.gmra.mrb[0].mxu0 %v254
    %v617 = vpop.f32.mrb[0].mxu0
    %v618 = vadd.f32 0.0, %v617
    %v619 = vpop.f32.mrb[0].mxu0
    %v620 = vadd.f32 0.0, %v619
    %621 = vmatprep.mubr.f32.mxu0 0.0
    %622 = vmatmul.mubr.f32.gmra.mrb[0].mxu0 %v255
    %v623 = vpop.f32.mrb[0].mxu0
    %v624 = vadd.f32 0.0, %v623
    %v625 = vpop.f32.mrb[0].mxu0
    %v626 = vadd.f32 0.0, %v625
    %627 = vmatprep.mubr.f32.mxu0 0.0
    %628 = vmatmul.mubr.f32.gmra.mrb[0].mxu0 %v256
    %v629 = vpop.f32.mrb[0].mxu0
    %v630 = vadd.f32 0.0, %v629
    %v631 = vpop.f32.mrb[0].mxu0
    %v632 = vadd.f32 0.0, %v631
    %633 = vmatprep.mubr.f32.mxu0 0.0
    %634 = vmatmul.mubr.f32.gmra.mrb[0].mxu0 %v257
    %v635 = vpop.f32.mrb[0].mxu0
    %v636 = vadd.f32 0.0, %v635
    %v637 = vpop.f32.mrb[0].mxu0
    %v638 = vadd.f32 0.0, %v637
    %639 = vdwg.mxu0
    %640 = vmatprep.subr.mxu0 %v471
    %641 = vmatpush1.msra.mxu0 %v470
    %642 = vmatprep.subr.mxu0 %v473
    %643 = vmatpush1.msra.mxu0 %v472
    %644 = vmatprep.subr.mxu0 %v475
    %645 = vmatpush1.msra.mxu0 %v474
    %646 = vmatprep.subr.mxu0 %v477
    %647 = vmatpush1.msra.mxu0 %v476
    %648 = vmatprep.subr.mxu0 %v479
    %649 = vmatpush1.msra.mxu0 %v478
    %650 = vmatprep.subr.mxu0 %v481
    %651 = vmatpush1.msra.mxu0 %v480
    %652 = vmatprep.subr.mxu0 %v483
    %653 = vmatpush1.msra.mxu0 %v482
    %654 = vmatprep.subr.mxu0 %v485
    %655 = vmatpush1.msra.mxu0 %v484
    %656 = vmatprep.subr.mxu0 %v487
    %657 = vmatpush1.msra.mxu0 %v486
    %658 = vmatprep.subr.mxu0 %v489
    %659 = vmatpush1.msra.mxu0 %v488
    %660 = vmatprep.subr.mxu0 %v491
    %661 = vmatpush1.msra.mxu0 %v490
    %662 = vmatprep.subr.mxu0 %v493
    %663 = vmatpush1.msra.mxu0 %v492
    %664 = vmatprep.subr.mxu0 %v495
    %665 = vmatpush1.msra.mxu0 %v494
    %666 = vmatprep.subr.mxu0 %v497
    %667 = vmatpush1.msra.mxu0 %v496
    %668 = vmatprep.subr.mxu0 %v499
    %669 = vmatpush1.msra.mxu0 %v498
    %670 = vmatprep.subr.mxu0 %v501
    %671 = vmatpush1.msra.mxu0 %v500
    %672 = vmatprep.subr.mxu0 0.0
    %673 = vmatpush1.msra.mxu0 0.0
    %674 = vmatprep.subr.mxu0 0.0
    %675 = vmatpush1.msra.mxu0 0.0
    %676 = vmatprep.subr.mxu0 0.0
    %677 = vmatpush1.msra.mxu0 0.0
    %678 = vmatprep.subr.mxu0 0.0
    %679 = vmatpush1.msra.mxu0 0.0
    %680 = vmatprep.subr.mxu0 0.0
    %681 = vmatpush1.msra.mxu0 0.0
    %682 = vmatprep.subr.mxu0 0.0
    %683 = vmatpush1.msra.mxu0 0.0
    %684 = vmatprep.subr.mxu0 0.0
    %685 = vmatpush1.msra.mxu0 0.0
    %686 = vmatprep.subr.mxu0 0.0
    %687 = vmatpush1.msra.mxu0 0.0
    %688 = vmatprep.subr.mxu0 0.0
    %689 = vmatpush1.msra.mxu0 0.0
    %690 = vmatprep.subr.mxu0 0.0
    %691 = vmatpush1.msra.mxu0 0.0
    %692 = vmatprep.subr.mxu0 0.0
    %693 = vmatpush1.msra.mxu0 0.0
    %694 = vmatprep.subr.mxu0 0.0
    %695 = vmatpush1.msra.mxu0 0.0
    %696 = vmatprep.subr.mxu0 0.0
    %697 = vmatpush1.msra.mxu0 0.0
    %698 = vmatprep.subr.mxu0 0.0
    %699 = vmatpush1.msra.mxu0 0.0
    %700 = vmatprep.subr.mxu0 0.0
    %701 = vmatpush1.msra.mxu0 0.0
    %702 = vmatprep.subr.mxu0 0.0
    %703 = vmatpush1.msra.mxu0 0.0
    %704 = vmatprep.mubr.f32.mxu0 0.0
    %705 = vmatmul.mubr.f32.gmra.mrb[0].mxu0 %v339
    %v706 = vpop.f32.mrb[0].mxu0
    %v707 = vadd.f32 %v618, %v706
    %v708 = vpop.f32.mrb[0].mxu0
    %v709 = vadd.f32 %v620, %v708
    %710 = vmatprep.mubr.f32.mxu0 0.0
    %711 = vmatmul.mubr.f32.gmra.mrb[0].mxu0 %v344
    %v712 = vpop.f32.mrb[0].mxu0
    %v713 = vadd.f32 %v624, %v712
    %v714 = vpop.f32.mrb[0].mxu0
    %v715 = vadd.f32 %v626, %v714
    %716 = vmatprep.mubr.f32.mxu0 0.0
    %717 = vmatmul.mubr.f32.gmra.mrb[0].mxu0 %v349
    %v718 = vpop.f32.mrb[0].mxu0
    %v719 = vadd.f32 %v630, %v718
    %v720 = vpop.f32.mrb[0].mxu0
    %v721 = vadd.f32 %v632, %v720
    %722 = vmatprep.mubr.f32.mxu0 0.0
    %723 = vmatmul.mubr.f32.gmra.mrb[0].mxu0 %v354
    %v724 = vpop.f32.mrb[0].mxu0
    %v725 = vadd.f32 %v636, %v724
    %v726 = vpop.f32.mrb[0].mxu0
    %v727 = vadd.f32 %v638, %v726
    %728 = vdwg.mxu0
    %s729 = scalar_lea.vmem [#allocation2], 256
    %v730 = vld [vmem:[%s729] sm:$0xff]
    %v731 = vld [vmem:[%s729 + $0x8] sm:$0xff]
    %v732 = vld [vmem:[%s729 + $0x10] sm:$0xff]
    %v733 = vld [vmem:[%s729 + $0x18] sm:$0xff]
    %v734 = vld [vmem:[%s729 + $0x20] sm:$0xff]
    %v735 = vld [vmem:[%s729 + $0x28] sm:$0xff]
    %v736 = vld [vmem:[%s729 + $0x30] sm:$0xff]
    %v737 = vld [vmem:[%s729 + $0x38] sm:$0xff]
    %v738 = vld [vmem:[%s729 + $0x40] sm:$0xff]
    %v739 = vld [vmem:[%s729 + $0x48] sm:$0xff]
    %v740 = vld [vmem:[%s729 + $0x50] sm:$0xff]
    %v741 = vld [vmem:[%s729 + $0x58] sm:$0xff]
    %v742 = vld [vmem:[%s729 + $0x60] sm:$0xff]
    %v743 = vld [vmem:[%s729 + $0x68] sm:$0xff]
    %v744 = vld [vmem:[%s729 + $0x70] sm:$0xff]
    %v745 = vld [vmem:[%s729 + $0x78] sm:$0xff]
    %v746 = vunpack.c.l.bf16 %v730
    %v747 = vunpack.c.h.bf16 %v730
    %v748 = vunpack.c.l.bf16 %v731
    %v749 = vunpack.c.h.bf16 %v731
    %v750 = vunpack.c.l.bf16 %v732
    %v751 = vunpack.c.h.bf16 %v732
    %v752 = vunpack.c.l.bf16 %v733
    %v753 = vunpack.c.h.bf16 %v733
    %v754 = vunpack.c.l.bf16 %v734
    %v755 = vunpack.c.h.bf16 %v734
    %v756 = vunpack.c.l.bf16 %v735
    %v757 = vunpack.c.h.bf16 %v735
    %v758 = vunpack.c.l.bf16 %v736
    %v759 = vunpack.c.h.bf16 %v736
    %v760 = vunpack.c.l.bf16 %v737
    %v761 = vunpack.c.h.bf16 %v737
    %v762 = vunpack.c.l.bf16 %v738
    %v763 = vunpack.c.h.bf16 %v738
    %v764 = vunpack.c.l.bf16 %v739
    %v765 = vunpack.c.h.bf16 %v739
    %v766 = vunpack.c.l.bf16 %v740
    %v767 = vunpack.c.h.bf16 %v740
    %v768 = vunpack.c.l.bf16 %v741
    %v769 = vunpack.c.h.bf16 %v741
    %v770 = vunpack.c.l.bf16 %v742
    %v771 = vunpack.c.h.bf16 %v742
    %v772 = vunpack.c.l.bf16 %v743
    %v773 = vunpack.c.h.bf16 %v743
    %v774 = vunpack.c.l.bf16 %v744
    %v775 = vunpack.c.h.bf16 %v744
    %v776 = vunpack.c.l.bf16 %v745
    %v777 = vunpack.c.h.bf16 %v745
    %778 = vmatprep.subr.mxu0 %v747
    %779 = vmatpush1.msra.mxu0 %v746
    %780 = vmatprep.subr.mxu0 %v749
    %781 = vmatpush1.msra.mxu0 %v748
    %782 = vmatprep.subr.mxu0 %v751
    %783 = vmatpush1.msra.mxu0 %v750
    %784 = vmatprep.subr.mxu0 %v753
    %785 = vmatpush1.msra.mxu0 %v752
    %786 = vmatprep.subr.mxu0 %v755
    %787 = vmatpush1.msra.mxu0 %v754
    %788 = vmatprep.subr.mxu0 %v757
    %789 = vmatpush1.msra.mxu0 %v756
    %790 = vmatprep.subr.mxu0 %v759
    %791 = vmatpush1.msra.mxu0 %v758
    %792 = vmatprep.subr.mxu0 %v761
    %793 = vmatpush1.msra.mxu0 %v760
    %794 = vmatprep.subr.mxu0 %v763
    %795 = vmatpush1.msra.mxu0 %v762
    %796 = vmatprep.subr.mxu0 %v765
    %797 = vmatpush1.msra.mxu0 %v764
    %798 = vmatprep.subr.mxu0 %v767
    %799 = vmatpush1.msra.mxu0 %v766
    %800 = vmatprep.subr.mxu0 %v769
    %801 = vmatpush1.msra.mxu0 %v768
    %802 = vmatprep.subr.mxu0 %v771
    %803 = vmatpush1.msra.mxu0 %v770
    %804 = vmatprep.subr.mxu0 %v773
    %805 = vmatpush1.msra.mxu0 %v772
    %806 = vmatprep.subr.mxu0 %v775
    %807 = vmatpush1.msra.mxu0 %v774
    %808 = vmatprep.subr.mxu0 %v777
    %809 = vmatpush1.msra.mxu0 %v776
    %810 = vmatprep.subr.mxu0 0.0
    %811 = vmatpush1.msra.mxu0 0.0
    %812 = vmatprep.subr.mxu0 0.0
    %813 = vmatpush1.msra.mxu0 0.0
    %814 = vmatprep.subr.mxu0 0.0
    %815 = vmatpush1.msra.mxu0 0.0
    %816 = vmatprep.subr.mxu0 0.0
    %817 = vmatpush1.msra.mxu0 0.0
    %818 = vmatprep.subr.mxu0 0.0
    %819 = vmatpush1.msra.mxu0 0.0
    %820 = vmatprep.subr.mxu0 0.0
    %821 = vmatpush1.msra.mxu0 0.0
    %822 = vmatprep.subr.mxu0 0.0
    %823 = vmatpush1.msra.mxu0 0.0
    %824 = vmatprep.subr.mxu0 0.0
    %825 = vmatpush1.msra.mxu0 0.0
    %826 = vmatprep.subr.mxu0 0.0
    %827 = vmatpush1.msra.mxu0 0.0
    %828 = vmatprep.subr.mxu0 0.0
    %829 = vmatpush1.msra.mxu0 0.0
    %830 = vmatprep.subr.mxu0 0.0
    %831 = vmatpush1.msra.mxu0 0.0
    %832 = vmatprep.subr.mxu0 0.0
    %833 = vmatpush1.msra.mxu0 0.0
    %834 = vmatprep.subr.mxu0 0.0
    %835 = vmatpush1.msra.mxu0 0.0
    %836 = vmatprep.subr.mxu0 0.0
    %837 = vmatpush1.msra.mxu0 0.0
    %838 = vmatprep.subr.mxu0 0.0
    %839 = vmatpush1.msra.mxu0 0.0
    %840 = vmatprep.subr.mxu0 0.0
    %841 = vmatpush1.msra.mxu0 0.0
    %842 = vmatprep.mubr.f32.mxu0 0.0
    %843 = vmatmul.mubr.f32.gmra.mrb[0].mxu0 %v436
    %v844 = vpop.f32.mrb[0].mxu0
    %v845 = vadd.f32 0.0, %v844
    %v846 = vpop.f32.mrb[0].mxu0
    %v847 = vadd.f32 0.0, %v846
    %848 = vmatprep.mubr.f32.mxu0 0.0
    %849 = vmatmul.mubr.f32.gmra.mrb[0].mxu0 %v441
    %v850 = vpop.f32.mrb[0].mxu0
    %v851 = vadd.f32 0.0, %v850
    %v852 = vpop.f32.mrb[0].mxu0
    %v853 = vadd.f32 0.0, %v852
    %854 = vmatprep.mubr.f32.mxu0 0.0
    %855 = vmatmul.mubr.f32.gmra.mrb[0].mxu0 %v446
    %v856 = vpop.f32.mrb[0].mxu0
    %v857 = vadd.f32 0.0, %v856
    %v858 = vpop.f32.mrb[0].mxu0
    %v859 = vadd.f32 0.0, %v858
    %860 = vmatprep.mubr.f32.mxu0 0.0
    %861 = vmatmul.mubr.f32.gmra.mrb[0].mxu0 %v451
    %v862 = vpop.f32.mrb[0].mxu0
    %v863 = vadd.f32 0.0, %v862
    %v864 = vpop.f32.mrb[0].mxu0
    %v865 = vadd.f32 0.0, %v864
    %866 = vdwg.mxu0
    %v867 = vadd.f32 %v707, %v845
    %v868 = vadd.f32 %v709, %v847
    %v869 = vadd.f32 %v713, %v851
    %v870 = vadd.f32 %v715, %v853
    %v871 = vadd.f32 %v719, %v857
    %v872 = vadd.f32 %v721, %v859
    %v873 = vadd.f32 %v725, %v863
    %v874 = vadd.f32 %v727, %v865
    %v876 = vlaneseq
    %v877 = vshrl.u32 %v876, 7
    %v878 = vsub.s32 0, %v877
    %v879 = vrot.slane %v258, %v878
    %v880 = vlaneseq
    %v881 = vshrl.u32 %v880, 7
    %v882 = vsub.s32 1, %v881
    %v883 = vrot.slane %v258, %v882
    %v886 = vadd.f32 %v867, %v879
    %v887 = vadd.f32 %v868, %v883
    %v888 = vadd.f32 %v869, %v879
    %v889 = vadd.f32 %v870, %v883
    %v890 = vadd.f32 %v871, %v879
    %v891 = vadd.f32 %v872, %v883
    %v892 = vadd.f32 %v873, %v879
    %v893 = vadd.f32 %v874, %v883
    %v894 = vld [vmem:[%s3] sm:$0x3]
    %v895 = vld [vmem:[%s4] sm:$0x3]
    %v896 = vadd.f32 %v886, %v888
    %v897 = vadd.f32 %v896, %v890
    %v898 = vadd.f32 %v897, %v892
    %v899 = vrot.slane %v898, 4
    %v900 = vadd.f32 %v898, %v899
    %v901 = vrot.slane %v900, 2
    %v902 = vadd.f32 %v900, %v901
    %v903 = vrot.slane %v902, 1
    %v904 = vadd.f32 %v902, %v903
    %v905 = vadd.f32 %v887, %v889
    %v906 = vadd.f32 %v905, %v891
    %v907 = vadd.f32 %v906, %v893
    %v908 = vrot.slane %v907, 4
    %v909 = vadd.f32 %v907, %v908
    %v910 = vrot.slane %v909, 2
    %v911 = vadd.f32 %v909, %v910
    %v912 = vrot.slane %v911, 1
    %v913 = vadd.f32 %v911, %v912
    %v914 = vmul.f32 %v886, %v886
    %v915 = vmul.f32 %v887, %v887
    %v916 = vmul.f32 %v888, %v888
    %v917 = vmul.f32 %v889, %v889
    %v918 = vmul.f32 %v890, %v890
    %v919 = vmul.f32 %v891, %v891
    %v920 = vmul.f32 %v892, %v892
    %v921 = vmul.f32 %v893, %v893
    %v922 = vadd.f32 %v914, %v916
    %v923 = vadd.f32 %v922, %v918
    %v924 = vadd.f32 %v923, %v920
    %v925 = vrot.slane %v924, 4
    %v926 = vadd.f32 %v924, %v925
    %v927 = vrot.slane %v926, 2
    %v928 = vadd.f32 %v926, %v927
    %v929 = vrot.slane %v928, 1
    %v930 = vadd.f32 %v928, %v929
    %v931 = vadd.f32 %v915, %v917
    %v932 = vadd.f32 %v931, %v919
    %v933 = vadd.f32 %v932, %v921
    %v934 = vrot.slane %v933, 4
    %v935 = vadd.f32 %v933, %v934
    %v936 = vrot.slane %v935, 2
    %v937 = vadd.f32 %v935, %v936
    %v938 = vrot.slane %v937, 1
    %v939 = vadd.f32 %v937, %v938
    %vm940 = vcmask 1040384
    %v941 = vsel %vm940, %v904, %v930
    %v942 = vsel %vm940, %v913, %v939
    %943 = vmatprep.subr.mxu0 %v191
    %944 = vmatpush1.msra.mxu0 %v190
    %945 = vmatprep.subr.mxu0 %v193
    %946 = vmatpush1.msra.mxu0 %v192
    %947 = vmatprep.subr.mxu0 %v195
    %948 = vmatpush1.msra.mxu0 %v194
    %949 = vmatprep.subr.mxu0 %v197
    %950 = vmatpush1.msra.mxu0 %v196
    %951 = vmatprep.subr.mxu0 %v199
    %952 = vmatpush1.msra.mxu0 %v198
    %953 = vmatprep.subr.mxu0 %v201
    %954 = vmatpush1.msra.mxu0 %v200
    %955 = vmatprep.subr.mxu0 %v203
    %956 = vmatpush1.msra.mxu0 %v202
    %957 = vmatprep.subr.mxu0 %v205
    %958 = vmatpush1.msra.mxu0 %v204
    %959 = vmatprep.subr.mxu0 %v207
    %960 = vmatpush1.msra.mxu0 %v206
    %961 = vmatprep.subr.mxu0 %v209
    %962 = vmatpush1.msra.mxu0 %v208
    %963 = vmatprep.subr.mxu0 %v211
    %964 = vmatpush1.msra.mxu0 %v210
    %965 = vmatprep.subr.mxu0 %v213
    %966 = vmatpush1.msra.mxu0 %v212
    %967 = vmatprep.subr.mxu0 %v215
    %968 = vmatpush1.msra.mxu0 %v214
    %969 = vmatprep.subr.mxu0 %v217
    %970 = vmatpush1.msra.mxu0 %v216
    %971 = vmatprep.subr.mxu0 %v219
    %972 = vmatpush1.msra.mxu0 %v218
    %973 = vmatprep.subr.mxu0 %v221
    %974 = vmatpush1.msra.mxu0 %v220
    %975 = vmatprep.subr.mxu0 %v223
    %976 = vmatpush1.msra.mxu0 %v222
    %977 = vmatprep.subr.mxu0 %v225
    %978 = vmatpush1.msra.mxu0 %v224
    %979 = vmatprep.subr.mxu0 %v227
    %980 = vmatpush1.msra.mxu0 %v226
    %981 = vmatprep.subr.mxu0 %v229
    %982 = vmatpush1.msra.mxu0 %v228
    %983 = vmatprep.subr.mxu0 %v231
    %984 = vmatpush1.msra.mxu0 %v230
    %985 = vmatprep.subr.mxu0 %v233
    %986 = vmatpush1.msra.mxu0 %v232
    %987 = vmatprep.subr.mxu0 %v235
    %988 = vmatpush1.msra.mxu0 %v234
    %989 = vmatprep.subr.mxu0 %v237
    %990 = vmatpush1.msra.mxu0 %v236
    %991 = vmatprep.subr.mxu0 %v239
    %992 = vmatpush1.msra.mxu0 %v238
    %993 = vmatprep.subr.mxu0 %v241
    %994 = vmatpush1.msra.mxu0 %v240
    %995 = vmatprep.subr.mxu0 %v243
    %996 = vmatpush1.msra.mxu0 %v242
    %997 = vmatprep.subr.mxu0 %v245
    %998 = vmatpush1.msra.mxu0 %v244
    %999 = vmatprep.subr.mxu0 %v247
    %1000 = vmatpush1.msra.mxu0 %v246
    %1001 = vmatprep.subr.mxu0 %v249
    %1002 = vmatpush1.msra.mxu0 %v248
    %1003 = vmatprep.subr.mxu0 %v251
    %1004 = vmatpush1.msra.mxu0 %v250
    %1005 = vmatprep.subr.mxu0 %v253
    %1006 = vmatpush1.msra.mxu0 %v252
    %1007 = vmatprep.mubr.f32.mxu0 %v942
    %1008 = vmatmul.mubr.f32.gmra.mrb[0].mxu0 %v941
    %v1009 = vpop.f32.mrb[0].mxu0
    %v1010 = vadd.f32 0.0, %v1009
    %v1011 = vpop.f32.mrb[0].mxu0
    %v1012 = vadd.f32 0.0, %v1011
    %1013 = vdwg.mxu0
    %v1014 = vmul.f32 %v1010, 0.001953125
    %v1015 = vmul.f32 %v1012, 0.001953125
    %v1016 = vmul.f32 %v1014, %v1014
    %v1017 = vmul.f32 %v1015, %v1015
    %v1020 = vrot.slane %v1016, 7
    %v1021 = vrot.slane %v1017, 7
    %v1024 = vsub.f32 %v1014, %v1020
    %v1025 = vsub.f32 %v1015, %v1021
    %v1026 = vadd.f32 %v1024, 1e-05
    %v1027 = vadd.f32 %v1025, 1e-05
    %v1028 = vrsqrt.pop %v1026
    %v1029 = vrsqrt.pop %v1027
    %v1032 = vcombine.low %v1028, %v1029
    %v1034 = vunpack.c.l.s4 1966171168
    %v1035 = vunpack.c.0.s8 %v1034
    %v1036 = vlaneseq
    %v1037 = vshrl.u32 %v1036, 7
    %v1038 = vsub.s32 %v1035, %v1037
    %v1039 = vrot.slane %v1032, %v1038
    %v1040 = vcombine.high %v1039, %v1039
    %v1042 = vunpack.c.l.s4 1966171168
    %v1043 = vunpack.c.0.s8 %v1042
    %v1044 = vlaneseq
    %v1045 = vshrl.u32 %v1044, 7
    %v1046 = vsub.s32 %v1043, %v1045
    %v1047 = vrot.slane %v1040, %v1046
    %v1049 = vmul.f32 %v894, %v1047
    %v1051 = vlaneseq
    %v1052 = vshrl.u32 %v1051, 7
    %v1053 = vsub.s32 0, %v1052
    %v1054 = vrot.slane %v1049, %v1053
    %v1055 = vlaneseq
    %v1056 = vshrl.u32 %v1055, 7
    %v1057 = vsub.s32 1, %v1056
    %v1058 = vrot.slane %v1049, %v1057
    %v1061 = vmul.f32 %v1014, %v1054
    %v1062 = vmul.f32 %v1015, %v1058
    %v1065 = vcombine.low %v1061, %v1062
    %v1067 = vunpack.c.l.s4 1966171168
    %v1068 = vunpack.c.0.s8 %v1067
    %v1069 = vlaneseq
    %v1070 = vshrl.u32 %v1069, 7
    %v1071 = vsub.s32 %v1068, %v1070
    %v1072 = vrot.slane %v1065, %v1071
    %v1074 = vunpack.c.l.s4 1966171168
    %v1075 = vunpack.c.0.s8 %v1074
    %v1076 = vlaneseq
    %v1077 = vshrl.u32 %v1076, 7
    %v1078 = vsub.s32 %v1075, %v1077
    %v1079 = vrot.slane %v1072, %v1078
    %v1081 = vsub.f32 %v895, %v1079
    %v1082 = vmul.f32 %v886, %v1054
    %v1083 = vmul.f32 %v887, %v1058
    %v1084 = vmul.f32 %v888, %v1054
    %v1085 = vmul.f32 %v889, %v1058
    %v1086 = vmul.f32 %v890, %v1054
    %v1087 = vmul.f32 %v891, %v1058
    %v1088 = vmul.f32 %v892, %v1054
    %v1089 = vmul.f32 %v893, %v1058
    %v1091 = vlaneseq
    %v1092 = vshrl.u32 %v1091, 7
    %v1093 = vsub.s32 0, %v1092
    %v1094 = vrot.slane %v1081, %v1093
    %v1095 = vlaneseq
    %v1096 = vshrl.u32 %v1095, 7
    %v1097 = vsub.s32 1, %v1096
    %v1098 = vrot.slane %v1081, %v1097
    %v1101 = vadd.f32 %v1082, %v1094
    %v1102 = vadd.f32 %v1083, %v1098
    %v1103 = vadd.f32 %v1084, %v1094
    %v1104 = vadd.f32 %v1085, %v1098
    %v1105 = vadd.f32 %v1086, %v1094
    %v1106 = vadd.f32 %v1087, %v1098
    %v1107 = vadd.f32 %v1088, %v1094
    %v1108 = vadd.f32 %v1089, %v1098
    %v1109 = vmax.f32 %v1101, 0.0
    %v1110 = vmax.f32 %v1102, 0.0
    %v1111 = vmax.f32 %v1103, 0.0
    %v1112 = vmax.f32 %v1104, 0.0
    %v1113 = vmax.f32 %v1105, 0.0
    %v1114 = vmax.f32 %v1106, 0.0
    %v1115 = vmax.f32 %v1107, 0.0
    %v1116 = vmax.f32 %v1108, 0.0
    %v1117 = vld [vmem:[%s6] sm:$0x3]
    %1118 = vmatprep.subr.mxu0 %v1110
    %1119 = vmatpush1.msra.mxu0 %v1109
    %1120 = vmatprep.subr.mxu0 %v1112
    %1121 = vmatpush1.msra.mxu0 %v1111
    %1122 = vmatprep.subr.mxu0 %v1114
    %1123 = vmatpush1.msra.mxu0 %v1113
    %1124 = vmatprep.subr.mxu0 %v1116
    %1125 = vmatpush1.msra.mxu0 %v1115
    %1126 = vmatprep.subr.mxu0 0.0
    %1127 = vmatpush1.msra.mxu0 0.0
    %1128 = vmatprep.subr.mxu0 0.0
    %1129 = vmatpush1.msra.mxu0 0.0
    %1130 = vmatprep.subr.mxu0 0.0
    %1131 = vmatpush1.msra.mxu0 0.0
    %1132 = vmatprep.subr.mxu0 0.0
    %1133 = vmatpush1.msra.mxu0 0.0
    %1134 = vmatprep.subr.mxu0 0.0
    %1135 = vmatpush1.msra.mxu0 0.0
    %1136 = vmatprep.subr.mxu0 0.0
    %1137 = vmatpush1.msra.mxu0 0.0
    %1138 = vmatprep.subr.mxu0 0.0
    %1139 = vmatpush1.msra.mxu0 0.0
    %1140 = vmatprep.subr.mxu0 0.0
    %1141 = vmatpush1.msra.mxu0 0.0
    %1142 = vmatprep.subr.mxu0 0.0
    %1143 = vmatpush1.msra.mxu0 0.0
    %1144 = vmatprep.subr.mxu0 0.0
    %1145 = vmatpush1.msra.mxu0 0.0
    %1146 = vmatprep.subr.mxu0 0.0
    %1147 = vmatpush1.msra.mxu0 0.0
    %1148 = vmatprep.subr.mxu0 0.0
    %1149 = vmatpush1.msra.mxu0 0.0
    %1150 = vmatprep.subr.mxu0 0.0
    %1151 = vmatpush1.msra.mxu0 0.0
    %1152 = vmatprep.subr.mxu0 0.0
    %1153 = vmatpush1.msra.mxu0 0.0
    %1154 = vmatprep.subr.mxu0 0.0
    %1155 = vmatpush1.msra.mxu0 0.0
    %1156 = vmatprep.subr.mxu0 0.0
    %1157 = vmatpush1.msra.mxu0 0.0
    %1158 = vmatprep.subr.mxu0 0.0
    %1159 = vmatpush1.msra.mxu0 0.0
    %1160 = vmatprep.subr.mxu0 0.0
    %1161 = vmatpush1.msra.mxu0 0.0
    %1162 = vmatprep.subr.mxu0 0.0
    %1163 = vmatpush1.msra.mxu0 0.0
    %1164 = vmatprep.subr.mxu0 0.0
    %1165 = vmatpush1.msra.mxu0 0.0
    %1166 = vmatprep.subr.mxu0 0.0
    %1167 = vmatpush1.msra.mxu0 0.0
    %1168 = vmatprep.subr.mxu0 0.0
    %1169 = vmatpush1.msra.mxu0 0.0
    %1170 = vmatprep.subr.mxu0 0.0
    %1171 = vmatpush1.msra.mxu0 0.0
    %1172 = vmatprep.subr.mxu0 0.0
    %1173 = vmatpush1.msra.mxu0 0.0
    %1174 = vmatprep.subr.mxu0 0.0
    %1175 = vmatpush1.msra.mxu0 0.0
    %1176 = vmatprep.subr.mxu0 0.0
    %1177 = vmatpush1.msra.mxu0 0.0
    %1178 = vmatprep.subr.mxu0 0.0
    %1179 = vmatpush1.msra.mxu0 0.0
    %1180 = vmatprep.subr.mxu0 0.0
    %1181 = vmatpush1.msra.mxu0 0.0
    %1182 = vmatprep.mubr.f32.mxu0 0.0
    %1183 = vmatmul.mubr.f32.gmra.mrb[0].mxu0 %v261
    %v1184 = vpop.f32.mrb[0].mxu0
    %v1185 = vadd.f32 0.0, %v1184
    %v1186 = vpop.f32.mrb[0].mxu0
    %v1187 = vadd.f32 0.0, %v1186
    %1188 = vmatprep.mubr.f32.mxu0 0.0
    %1189 = vmatmul.mubr.f32.gmra.mrb[0].mxu0 %v264
    %v1190 = vpop.f32.mrb[0].mxu0
    %v1191 = vadd.f32 0.0, %v1190
    %v1192 = vpop.f32.mrb[0].mxu0
    %v1193 = vadd.f32 0.0, %v1192
    %1194 = vmatprep.mubr.f32.mxu0 0.0
    %1195 = vmatmul.mubr.f32.gmra.mrb[0].mxu0 %v267
    %v1196 = vpop.f32.mrb[0].mxu0
    %v1197 = vadd.f32 0.0, %v1196
    %v1198 = vpop.f32.mrb[0].mxu0
    %v1199 = vadd.f32 0.0, %v1198
    %1200 = vmatprep.mubr.f32.mxu0 0.0
    %1201 = vmatmul.mubr.f32.gmra.mrb[0].mxu0 %v270
    %v1202 = vpop.f32.mrb[0].mxu0
    %v1203 = vadd.f32 0.0, %v1202
    %v1204 = vpop.f32.mrb[0].mxu0
    %v1205 = vadd.f32 0.0, %v1204
    %1206 = vdwg.mxu0
    %1207 = vmatprep.subr.mxu0 %v1110
    %1208 = vmatpush1.msra.mxu0 %v1109
    %1209 = vmatprep.subr.mxu0 %v1112
    %1210 = vmatpush1.msra.mxu0 %v1111
    %1211 = vmatprep.subr.mxu0 %v1114
    %1212 = vmatpush1.msra.mxu0 %v1113
    %1213 = vmatprep.subr.mxu0 %v1116
    %1214 = vmatpush1.msra.mxu0 %v1115
    %1215 = vmatprep.subr.mxu0 0.0
    %1216 = vmatpush1.msra.mxu0 0.0
    %1217 = vmatprep.subr.mxu0 0.0
    %1218 = vmatpush1.msra.mxu0 0.0
    %1219 = vmatprep.subr.mxu0 0.0
    %1220 = vmatpush1.msra.mxu0 0.0
    %1221 = vmatprep.subr.mxu0 0.0
    %1222 = vmatpush1.msra.mxu0 0.0
    %1223 = vmatprep.subr.mxu0 0.0
    %1224 = vmatpush1.msra.mxu0 0.0
    %1225 = vmatprep.subr.mxu0 0.0
    %1226 = vmatpush1.msra.mxu0 0.0
    %1227 = vmatprep.subr.mxu0 0.0
    %1228 = vmatpush1.msra.mxu0 0.0
    %1229 = vmatprep.subr.mxu0 0.0
    %1230 = vmatpush1.msra.mxu0 0.0
    %1231 = vmatprep.subr.mxu0 0.0
    %1232 = vmatpush1.msra.mxu0 0.0
    %1233 = vmatprep.subr.mxu0 0.0
    %1234 = vmatpush1.msra.mxu0 0.0
    %1235 = vmatprep.subr.mxu0 0.0
    %1236 = vmatpush1.msra.mxu0 0.0
    %1237 = vmatprep.subr.mxu0 0.0
    %1238 = vmatpush1.msra.mxu0 0.0
    %1239 = vmatprep.subr.mxu0 0.0
    %1240 = vmatpush1.msra.mxu0 0.0
    %1241 = vmatprep.subr.mxu0 0.0
    %1242 = vmatpush1.msra.mxu0 0.0
    %1243 = vmatprep.subr.mxu0 0.0
    %1244 = vmatpush1.msra.mxu0 0.0
    %1245 = vmatprep.subr.mxu0 0.0
    %1246 = vmatpush1.msra.mxu0 0.0
    %1247 = vmatprep.subr.mxu0 0.0
    %1248 = vmatpush1.msra.mxu0 0.0
    %1249 = vmatprep.subr.mxu0 0.0
    %1250 = vmatpush1.msra.mxu0 0.0
    %1251 = vmatprep.subr.mxu0 0.0
    %1252 = vmatpush1.msra.mxu0 0.0
    %1253 = vmatprep.subr.mxu0 0.0
    %1254 = vmatpush1.msra.mxu0 0.0
    %1255 = vmatprep.subr.mxu0 0.0
    %1256 = vmatpush1.msra.mxu0 0.0
    %1257 = vmatprep.subr.mxu0 0.0
    %1258 = vmatpush1.msra.mxu0 0.0
    %1259 = vmatprep.subr.mxu0 0.0
    %1260 = vmatpush1.msra.mxu0 0.0
    %1261 = vmatprep.subr.mxu0 0.0
    %1262 = vmatpush1.msra.mxu0 0.0
    %1263 = vmatprep.subr.mxu0 0.0
    %1264 = vmatpush1.msra.mxu0 0.0
    %1265 = vmatprep.subr.mxu0 0.0
    %1266 = vmatpush1.msra.mxu0 0.0
    %1267 = vmatprep.subr.mxu0 0.0
    %1268 = vmatpush1.msra.mxu0 0.0
    %1269 = vmatprep.subr.mxu0 0.0
    %1270 = vmatpush1.msra.mxu0 0.0
    %1271 = vmatprep.mubr.f32.mxu0 0.0
    %1272 = vmatmul.mubr.f32.gmra.mrb[0].mxu0 %v358
    %v1273 = vpop.f32.mrb[0].mxu0
    %v1274 = vadd.f32 0.0, %v1273
    %v1275 = vpop.f32.mrb[0].mxu0
    %v1276 = vadd.f32 0.0, %v1275
    %1277 = vmatprep.mubr.f32.mxu0 0.0
    %1278 = vmatmul.mubr.f32.gmra.mrb[0].mxu0 %v361
    %v1279 = vpop.f32.mrb[0].mxu0
    %v1280 = vadd.f32 0.0, %v1279
    %v1281 = vpop.f32.mrb[0].mxu0
    %v1282 = vadd.f32 0.0, %v1281
    %1283 = vmatprep.mubr.f32.mxu0 0.0
    %1284 = vmatmul.mubr.f32.gmra.mrb[0].mxu0 %v364
    %v1285 = vpop.f32.mrb[0].mxu0
    %v1286 = vadd.f32 0.0, %v1285
    %v1287 = vpop.f32.mrb[0].mxu0
    %v1288 = vadd.f32 0.0, %v1287
    %1289 = vmatprep.mubr.f32.mxu0 0.0
    %1290 = vmatmul.mubr.f32.gmra.mrb[0].mxu0 %v367
    %v1291 = vpop.f32.mrb[0].mxu0
    %v1292 = vadd.f32 0.0, %v1291
    %v1293 = vpop.f32.mrb[0].mxu0
    %v1294 = vadd.f32 0.0, %v1293
    %1295 = vdwg.mxu0
    %v1296 = vld [vmem:[%s5] sm:$0xff]
    %v1297 = vld [vmem:[%s5 + $0x8] sm:$0xff]
    %v1298 = vld [vmem:[%s5 + $0x10] sm:$0xff]
    %v1299 = vld [vmem:[%s5 + $0x18] sm:$0xff]
    %v1300 = vld [vmem:[%s5 + $0x20] sm:$0xff]
    %v1301 = vld [vmem:[%s5 + $0x28] sm:$0xff]
    %v1302 = vld [vmem:[%s5 + $0x30] sm:$0xff]
    %v1303 = vld [vmem:[%s5 + $0x38] sm:$0xff]
    %v1304 = vld [vmem:[%s5 + $0x40] sm:$0xff]
    %v1305 = vld [vmem:[%s5 + $0x48] sm:$0xff]
    %v1306 = vld [vmem:[%s5 + $0x50] sm:$0xff]
    %v1307 = vld [vmem:[%s5 + $0x58] sm:$0xff]
    %v1308 = vld [vmem:[%s5 + $0x60] sm:$0xff]
    %v1309 = vld [vmem:[%s5 + $0x68] sm:$0xff]
    %v1310 = vld [vmem:[%s5 + $0x70] sm:$0xff]
    %v1311 = vld [vmem:[%s5 + $0x78] sm:$0xff]
    %v1312 = vld [vmem:[%s5 + $0x80] sm:$0xff]
    %v1313 = vld [vmem:[%s5 + $0x88] sm:$0xff]
    %v1314 = vld [vmem:[%s5 + $0x90] sm:$0xff]
    %v1315 = vld [vmem:[%s5 + $0x98] sm:$0xff]
    %v1316 = vld [vmem:[%s5 + $0xa0] sm:$0xff]
    %v1317 = vld [vmem:[%s5 + $0xa8] sm:$0xff]
    %v1318 = vld [vmem:[%s5 + $0xb0] sm:$0xff]
    %v1319 = vld [vmem:[%s5 + $0xb8] sm:$0xff]
    %v1320 = vld [vmem:[%s5 + $0xc0] sm:$0xff]
    %v1321 = vld [vmem:[%s5 + $0xc8] sm:$0xff]
    %v1322 = vld [vmem:[%s5 + $0xd0] sm:$0xff]
    %v1323 = vld [vmem:[%s5 + $0xd8] sm:$0xff]
    %v1324 = vld [vmem:[%s5 + $0xe0] sm:$0xff]
    %v1325 = vld [vmem:[%s5 + $0xe8] sm:$0xff]
    %v1326 = vld [vmem:[%s5 + $0xf0] sm:$0xff]
    %v1327 = vld [vmem:[%s5 + $0xf8] sm:$0xff]
    %v1328 = vunpack.c.l.bf16 %v1296
    %v1329 = vunpack.c.h.bf16 %v1296
    %v1330 = vunpack.c.l.bf16 %v1297
    %v1331 = vunpack.c.h.bf16 %v1297
    %v1332 = vunpack.c.l.bf16 %v1298
    %v1333 = vunpack.c.h.bf16 %v1298
    %v1334 = vunpack.c.l.bf16 %v1299
    %v1335 = vunpack.c.h.bf16 %v1299
    %v1336 = vunpack.c.l.bf16 %v1300
    %v1337 = vunpack.c.h.bf16 %v1300
    %v1338 = vunpack.c.l.bf16 %v1301
    %v1339 = vunpack.c.h.bf16 %v1301
    %v1340 = vunpack.c.l.bf16 %v1302
    %v1341 = vunpack.c.h.bf16 %v1302
    %v1342 = vunpack.c.l.bf16 %v1303
    %v1343 = vunpack.c.h.bf16 %v1303
    %v1344 = vunpack.c.l.bf16 %v1304
    %v1345 = vunpack.c.h.bf16 %v1304
    %v1346 = vunpack.c.l.bf16 %v1305
    %v1347 = vunpack.c.h.bf16 %v1305
    %v1348 = vunpack.c.l.bf16 %v1306
    %v1349 = vunpack.c.h.bf16 %v1306
    %v1350 = vunpack.c.l.bf16 %v1307
    %v1351 = vunpack.c.h.bf16 %v1307
    %v1352 = vunpack.c.l.bf16 %v1308
    %v1353 = vunpack.c.h.bf16 %v1308
    %v1354 = vunpack.c.l.bf16 %v1309
    %v1355 = vunpack.c.h.bf16 %v1309
    %v1356 = vunpack.c.l.bf16 %v1310
    %v1357 = vunpack.c.h.bf16 %v1310
    %v1358 = vunpack.c.l.bf16 %v1311
    %v1359 = vunpack.c.h.bf16 %v1311
    %v1360 = vunpack.c.l.bf16 %v1312
    %v1361 = vunpack.c.h.bf16 %v1312
    %v1362 = vunpack.c.l.bf16 %v1313
    %v1363 = vunpack.c.h.bf16 %v1313
    %v1364 = vunpack.c.l.bf16 %v1314
    %v1365 = vunpack.c.h.bf16 %v1314
    %v1366 = vunpack.c.l.bf16 %v1315
    %v1367 = vunpack.c.h.bf16 %v1315
    %v1368 = vunpack.c.l.bf16 %v1316
    %v1369 = vunpack.c.h.bf16 %v1316
    %v1370 = vunpack.c.l.bf16 %v1317
    %v1371 = vunpack.c.h.bf16 %v1317
    %v1372 = vunpack.c.l.bf16 %v1318
    %v1373 = vunpack.c.h.bf16 %v1318
    %v1374 = vunpack.c.l.bf16 %v1319
    %v1375 = vunpack.c.h.bf16 %v1319
    %v1376 = vunpack.c.l.bf16 %v1320
    %v1377 = vunpack.c.h.bf16 %v1320
    %v1378 = vunpack.c.l.bf16 %v1321
    %v1379 = vunpack.c.h.bf16 %v1321
    %v1380 = vunpack.c.l.bf16 %v1322
    %v1381 = vunpack.c.h.bf16 %v1322
    %v1382 = vunpack.c.l.bf16 %v1323
    %v1383 = vunpack.c.h.bf16 %v1323
    %v1384 = vunpack.c.l.bf16 %v1324
    %v1385 = vunpack.c.h.bf16 %v1324
    %v1386 = vunpack.c.l.bf16 %v1325
    %v1387 = vunpack.c.h.bf16 %v1325
    %v1388 = vunpack.c.l.bf16 %v1326
    %v1389 = vunpack.c.h.bf16 %v1326
    %v1390 = vunpack.c.l.bf16 %v1327
    %v1391 = vunpack.c.h.bf16 %v1327
    %s1392 = scalar_lea.vmem %s5, 256
    %v1393 = vld [vmem:[%s1392] sm:$0xff]
    %v1394 = vld [vmem:[%s1392 + $0x8] sm:$0xff]
    %v1395 = vld [vmem:[%s1392 + $0x10] sm:$0xff]
    %v1396 = vld [vmem:[%s1392 + $0x18] sm:$0xff]
    %v1397 = vld [vmem:[%s1392 + $0x20] sm:$0xff]
    %v1398 = vld [vmem:[%s1392 + $0x28] sm:$0xff]
    %v1399 = vld [vmem:[%s1392 + $0x30] sm:$0xff]
    %v1400 = vld [vmem:[%s1392 + $0x38] sm:$0xff]
    %v1401 = vld [vmem:[%s1392 + $0x40] sm:$0xff]
    %v1402 = vld [vmem:[%s1392 + $0x48] sm:$0xff]
    %v1403 = vld [vmem:[%s1392 + $0x50] sm:$0xff]
    %v1404 = vld [vmem:[%s1392 + $0x58] sm:$0xff]
    %v1405 = vld [vmem:[%s1392 + $0x60] sm:$0xff]
    %v1406 = vld [vmem:[%s1392 + $0x68] sm:$0xff]
    %v1407 = vld [vmem:[%s1392 + $0x70] sm:$0xff]
    %v1408 = vld [vmem:[%s1392 + $0x78] sm:$0xff]
    %v1409 = vld [vmem:[%s1392 + $0x80] sm:$0xff]
    %v1410 = vld [vmem:[%s1392 + $0x88] sm:$0xff]
    %v1411 = vld [vmem:[%s1392 + $0x90] sm:$0xff]
    %v1412 = vld [vmem:[%s1392 + $0x98] sm:$0xff]
    %v1413 = vld [vmem:[%s1392 + $0xa0] sm:$0xff]
    %v1414 = vld [vmem:[%s1392 + $0xa8] sm:$0xff]
    %v1415 = vld [vmem:[%s1392 + $0xb0] sm:$0xff]
    %v1416 = vld [vmem:[%s1392 + $0xb8] sm:$0xff]
    %v1417 = vld [vmem:[%s1392 + $0xc0] sm:$0xff]
    %v1418 = vld [vmem:[%s1392 + $0xc8] sm:$0xff]
    %v1419 = vld [vmem:[%s1392 + $0xd0] sm:$0xff]
    %v1420 = vld [vmem:[%s1392 + $0xd8] sm:$0xff]
    %v1421 = vld [vmem:[%s1392 + $0xe0] sm:$0xff]
    %v1422 = vld [vmem:[%s1392 + $0xe8] sm:$0xff]
    %v1423 = vld [vmem:[%s1392 + $0xf0] sm:$0xff]
    %v1424 = vld [vmem:[%s1392 + $0xf8] sm:$0xff]
    %v1425 = vunpack.c.l.bf16 %v1393
    %v1426 = vunpack.c.h.bf16 %v1393
    %v1427 = vunpack.c.l.bf16 %v1394
    %v1428 = vunpack.c.h.bf16 %v1394
    %v1429 = vunpack.c.l.bf16 %v1395
    %v1430 = vunpack.c.h.bf16 %v1395
    %v1431 = vunpack.c.l.bf16 %v1396
    %v1432 = vunpack.c.h.bf16 %v1396
    %v1433 = vunpack.c.l.bf16 %v1397
    %v1434 = vunpack.c.h.bf16 %v1397
    %v1435 = vunpack.c.l.bf16 %v1398
    %v1436 = vunpack.c.h.bf16 %v1398
    %v1437 = vunpack.c.l.bf16 %v1399
    %v1438 = vunpack.c.h.bf16 %v1399
    %v1439 = vunpack.c.l.bf16 %v1400
    %v1440 = vunpack.c.h.bf16 %v1400
    %v1441 = vunpack.c.l.bf16 %v1401
    %v1442 = vunpack.c.h.bf16 %v1401
    %v1443 = vunpack.c.l.bf16 %v1402
    %v1444 = vunpack.c.h.bf16 %v1402
    %v1445 = vunpack.c.l.bf16 %v1403
    %v1446 = vunpack.c.h.bf16 %v1403
    %v1447 = vunpack.c.l.bf16 %v1404
    %v1448 = vunpack.c.h.bf16 %v1404
    %v1449 = vunpack.c.l.bf16 %v1405
    %v1450 = vunpack.c.h.bf16 %v1405
    %v1451 = vunpack.c.l.bf16 %v1406
    %v1452 = vunpack.c.h.bf16 %v1406
    %v1453 = vunpack.c.l.bf16 %v1407
    %v1454 = vunpack.c.h.bf16 %v1407
    %v1455 = vunpack.c.l.bf16 %v1408
    %v1456 = vunpack.c.h.bf16 %v1408
    %v1457 = vunpack.c.l.bf16 %v1409
    %v1458 = vunpack.c.h.bf16 %v1409
    %v1459 = vunpack.c.l.bf16 %v1410
    %v1460 = vunpack.c.h.bf16 %v1410
    %v1461 = vunpack.c.l.bf16 %v1411
    %v1462 = vunpack.c.h.bf16 %v1411
    %v1463 = vunpack.c.l.bf16 %v1412
    %v1464 = vunpack.c.h.bf16 %v1412
    %v1465 = vunpack.c.l.bf16 %v1413
    %v1466 = vunpack.c.h.bf16 %v1413
    %v1467 = vunpack.c.l.bf16 %v1414
    %v1468 = vunpack.c.h.bf16 %v1414
    %v1469 = vunpack.c.l.bf16 %v1415
    %v1470 = vunpack.c.h.bf16 %v1415
    %v1471 = vunpack.c.l.bf16 %v1416
    %v1472 = vunpack.c.h.bf16 %v1416
    %v1473 = vunpack.c.l.bf16 %v1417
    %v1474 = vunpack.c.h.bf16 %v1417
    %v1475 = vunpack.c.l.bf16 %v1418
    %v1476 = vunpack.c.h.bf16 %v1418
    %v1477 = vunpack.c.l.bf16 %v1419
    %v1478 = vunpack.c.h.bf16 %v1419
    %v1479 = vunpack.c.l.bf16 %v1420
    %v1480 = vunpack.c.h.bf16 %v1420
    %v1481 = vunpack.c.l.bf16 %v1421
    %v1482 = vunpack.c.h.bf16 %v1421
    %v1483 = vunpack.c.l.bf16 %v1422
    %v1484 = vunpack.c.h.bf16 %v1422
    %v1485 = vunpack.c.l.bf16 %v1423
    %v1486 = vunpack.c.h.bf16 %v1423
    %v1487 = vunpack.c.l.bf16 %v1424
    %v1488 = vunpack.c.h.bf16 %v1424
    %1489 = vmatprep.subr.mxu0 %v1426
    %1490 = vmatpush1.msra.mxu0 %v1425
    %1491 = vmatprep.subr.mxu0 %v1428
    %1492 = vmatpush1.msra.mxu0 %v1427
    %1493 = vmatprep.subr.mxu0 %v1430
    %1494 = vmatpush1.msra.mxu0 %v1429
    %1495 = vmatprep.subr.mxu0 %v1432
    %1496 = vmatpush1.msra.mxu0 %v1431
    %1497 = vmatprep.subr.mxu0 %v1434
    %1498 = vmatpush1.msra.mxu0 %v1433
    %1499 = vmatprep.subr.mxu0 %v1436
    %1500 = vmatpush1.msra.mxu0 %v1435
    %1501 = vmatprep.subr.mxu0 %v1438
    %1502 = vmatpush1.msra.mxu0 %v1437
    %1503 = vmatprep.subr.mxu0 %v1440
    %1504 = vmatpush1.msra.mxu0 %v1439
    %1505 = vmatprep.subr.mxu0 %v1442
    %1506 = vmatpush1.msra.mxu0 %v1441
    %1507 = vmatprep.subr.mxu0 %v1444
    %1508 = vmatpush1.msra.mxu0 %v1443
    %1509 = vmatprep.subr.mxu0 %v1446
    %1510 = vmatpush1.msra.mxu0 %v1445
    %1511 = vmatprep.subr.mxu0 %v1448
    %1512 = vmatpush1.msra.mxu0 %v1447
    %1513 = vmatprep.subr.mxu0 %v1450
    %1514 = vmatpush1.msra.mxu0 %v1449
    %1515 = vmatprep.subr.mxu0 %v1452
    %1516 = vmatpush1.msra.mxu0 %v1451
    %1517 = vmatprep.subr.mxu0 %v1454
    %1518 = vmatpush1.msra.mxu0 %v1453
    %1519 = vmatprep.subr.mxu0 %v1456
    %1520 = vmatpush1.msra.mxu0 %v1455
    %1521 = vmatprep.subr.mxu0 %v1458
    %1522 = vmatpush1.msra.mxu0 %v1457
    %1523 = vmatprep.subr.mxu0 %v1460
    %1524 = vmatpush1.msra.mxu0 %v1459
    %1525 = vmatprep.subr.mxu0 %v1462
    %1526 = vmatpush1.msra.mxu0 %v1461
    %1527 = vmatprep.subr.mxu0 %v1464
    %1528 = vmatpush1.msra.mxu0 %v1463
    %1529 = vmatprep.subr.mxu0 %v1466
    %1530 = vmatpush1.msra.mxu0 %v1465
    %1531 = vmatprep.subr.mxu0 %v1468
    %1532 = vmatpush1.msra.mxu0 %v1467
    %1533 = vmatprep.subr.mxu0 %v1470
    %1534 = vmatpush1.msra.mxu0 %v1469
    %1535 = vmatprep.subr.mxu0 %v1472
    %1536 = vmatpush1.msra.mxu0 %v1471
    %1537 = vmatprep.subr.mxu0 %v1474
    %1538 = vmatpush1.msra.mxu0 %v1473
    %1539 = vmatprep.subr.mxu0 %v1476
    %1540 = vmatpush1.msra.mxu0 %v1475
    %1541 = vmatprep.subr.mxu0 %v1478
    %1542 = vmatpush1.msra.mxu0 %v1477
    %1543 = vmatprep.subr.mxu0 %v1480
    %1544 = vmatpush1.msra.mxu0 %v1479
    %1545 = vmatprep.subr.mxu0 %v1482
    %1546 = vmatpush1.msra.mxu0 %v1481
    %1547 = vmatprep.subr.mxu0 %v1484
    %1548 = vmatpush1.msra.mxu0 %v1483
    %1549 = vmatprep.subr.mxu0 %v1486
    %1550 = vmatpush1.msra.mxu0 %v1485
    %1551 = vmatprep.subr.mxu0 %v1488
    %1552 = vmatpush1.msra.mxu0 %v1487
    %1553 = vmatprep.mubr.f32.mxu0 %v1110
    %1554 = vmatmul.mubr.f32.gmra.mrb[0].mxu0 %v1109
    %v1555 = vpop.f32.mrb[0].mxu0
    %v1556 = vadd.f32 0.0, %v1555
    %v1557 = vpop.f32.mrb[0].mxu0
    %v1558 = vadd.f32 0.0, %v1557
    %1559 = vmatprep.mubr.f32.mxu0 %v1112
    %1560 = vmatmul.mubr.f32.gmra.mrb[0].mxu0 %v1111
    %v1561 = vpop.f32.mrb[0].mxu0
    %v1562 = vadd.f32 0.0, %v1561
    %v1563 = vpop.f32.mrb[0].mxu0
    %v1564 = vadd.f32 0.0, %v1563
    %1565 = vmatprep.mubr.f32.mxu0 %v1114
    %1566 = vmatmul.mubr.f32.gmra.mrb[0].mxu0 %v1113
    %v1567 = vpop.f32.mrb[0].mxu0
    %v1568 = vadd.f32 0.0, %v1567
    %v1569 = vpop.f32.mrb[0].mxu0
    %v1570 = vadd.f32 0.0, %v1569
    %1571 = vmatprep.mubr.f32.mxu0 %v1116
    %1572 = vmatmul.mubr.f32.gmra.mrb[0].mxu0 %v1115
    %v1573 = vpop.f32.mrb[0].mxu0
    %v1574 = vadd.f32 0.0, %v1573
    %v1575 = vpop.f32.mrb[0].mxu0
    %v1576 = vadd.f32 0.0, %v1575
    %1577 = vdwg.mxu0
    %1578 = vmatprep.subr.mxu0 %v1329
    %1579 = vmatpush1.msra.mxu0 %v1328
    %1580 = vmatprep.subr.mxu0 %v1331
    %1581 = vmatpush1.msra.mxu0 %v1330
    %1582 = vmatprep.subr.mxu0 %v1333
    %1583 = vmatpush1.msra.mxu0 %v1332
    %1584 = vmatprep.subr.mxu0 %v1335
    %1585 = vmatpush1.msra.mxu0 %v1334
    %1586 = vmatprep.subr.mxu0 %v1337
    %1587 = vmatpush1.msra.mxu0 %v1336
    %1588 = vmatprep.subr.mxu0 %v1339
    %1589 = vmatpush1.msra.mxu0 %v1338
    %1590 = vmatprep.subr.mxu0 %v1341
    %1591 = vmatpush1.msra.mxu0 %v1340
    %1592 = vmatprep.subr.mxu0 %v1343
    %1593 = vmatpush1.msra.mxu0 %v1342
    %1594 = vmatprep.subr.mxu0 %v1345
    %1595 = vmatpush1.msra.mxu0 %v1344
    %1596 = vmatprep.subr.mxu0 %v1347
    %1597 = vmatpush1.msra.mxu0 %v1346
    %1598 = vmatprep.subr.mxu0 %v1349
    %1599 = vmatpush1.msra.mxu0 %v1348
    %1600 = vmatprep.subr.mxu0 %v1351
    %1601 = vmatpush1.msra.mxu0 %v1350
    %1602 = vmatprep.subr.mxu0 %v1353
    %1603 = vmatpush1.msra.mxu0 %v1352
    %1604 = vmatprep.subr.mxu0 %v1355
    %1605 = vmatpush1.msra.mxu0 %v1354
    %1606 = vmatprep.subr.mxu0 %v1357
    %1607 = vmatpush1.msra.mxu0 %v1356
    %1608 = vmatprep.subr.mxu0 %v1359
    %1609 = vmatpush1.msra.mxu0 %v1358
    %1610 = vmatprep.subr.mxu0 %v1361
    %1611 = vmatpush1.msra.mxu0 %v1360
    %1612 = vmatprep.subr.mxu0 %v1363
    %1613 = vmatpush1.msra.mxu0 %v1362
    %1614 = vmatprep.subr.mxu0 %v1365
    %1615 = vmatpush1.msra.mxu0 %v1364
    %1616 = vmatprep.subr.mxu0 %v1367
    %1617 = vmatpush1.msra.mxu0 %v1366
    %1618 = vmatprep.subr.mxu0 %v1369
    %1619 = vmatpush1.msra.mxu0 %v1368
    %1620 = vmatprep.subr.mxu0 %v1371
    %1621 = vmatpush1.msra.mxu0 %v1370
    %1622 = vmatprep.subr.mxu0 %v1373
    %1623 = vmatpush1.msra.mxu0 %v1372
    %1624 = vmatprep.subr.mxu0 %v1375
    %1625 = vmatpush1.msra.mxu0 %v1374
    %1626 = vmatprep.subr.mxu0 %v1377
    %1627 = vmatpush1.msra.mxu0 %v1376
    %1628 = vmatprep.subr.mxu0 %v1379
    %1629 = vmatpush1.msra.mxu0 %v1378
    %1630 = vmatprep.subr.mxu0 %v1381
    %1631 = vmatpush1.msra.mxu0 %v1380
    %1632 = vmatprep.subr.mxu0 %v1383
    %1633 = vmatpush1.msra.mxu0 %v1382
    %1634 = vmatprep.subr.mxu0 %v1385
    %1635 = vmatpush1.msra.mxu0 %v1384
    %1636 = vmatprep.subr.mxu0 %v1387
    %1637 = vmatpush1.msra.mxu0 %v1386
    %1638 = vmatprep.subr.mxu0 %v1389
    %1639 = vmatpush1.msra.mxu0 %v1388
    %1640 = vmatprep.subr.mxu0 %v1391
    %1641 = vmatpush1.msra.mxu0 %v1390
    %1642 = vmatprep.mubr.f32.mxu0 %v1187
    %1643 = vmatmul.mubr.f32.gmra.mrb[0].mxu0 %v1185
    %v1644 = vpop.f32.mrb[0].mxu0
    %v1645 = vadd.f32 %v1556, %v1644
    %v1646 = vpop.f32.mrb[0].mxu0
    %v1647 = vadd.f32 %v1558, %v1646
    %1648 = vmatprep.mubr.f32.mxu0 %v1193
    %1649 = vmatmul.mubr.f32.gmra.mrb[0].mxu0 %v1191
    %v1650 = vpop.f32.mrb[0].mxu0
    %v1651 = vadd.f32 %v1562, %v1650
    %v1652 = vpop.f32.mrb[0].mxu0
    %v1653 = vadd.f32 %v1564, %v1652
    %1654 = vmatprep.mubr.f32.mxu0 %v1199
    %1655 = vmatmul.mubr.f32.gmra.mrb[0].mxu0 %v1197
    %v1656 = vpop.f32.mrb[0].mxu0
    %v1657 = vadd.f32 %v1568, %v1656
    %v1658 = vpop.f32.mrb[0].mxu0
    %v1659 = vadd.f32 %v1570, %v1658
    %1660 = vmatprep.mubr.f32.mxu0 %v1205
    %1661 = vmatmul.mubr.f32.gmra.mrb[0].mxu0 %v1203
    %v1662 = vpop.f32.mrb[0].mxu0
    %v1663 = vadd.f32 %v1574, %v1662
    %v1664 = vpop.f32.mrb[0].mxu0
    %v1665 = vadd.f32 %v1576, %v1664
    %1666 = vdwg.mxu0
    %s1667 = scalar_lea.vmem %s5, 512
    %v1668 = vld [vmem:[%s1667] sm:$0xff]
    %v1669 = vld [vmem:[%s1667 + $0x8] sm:$0xff]
    %v1670 = vld [vmem:[%s1667 + $0x10] sm:$0xff]
    %v1671 = vld [vmem:[%s1667 + $0x18] sm:$0xff]
    %v1672 = vld [vmem:[%s1667 + $0x20] sm:$0xff]
    %v1673 = vld [vmem:[%s1667 + $0x28] sm:$0xff]
    %v1674 = vld [vmem:[%s1667 + $0x30] sm:$0xff]
    %v1675 = vld [vmem:[%s1667 + $0x38] sm:$0xff]
    %v1676 = vld [vmem:[%s1667 + $0x40] sm:$0xff]
    %v1677 = vld [vmem:[%s1667 + $0x48] sm:$0xff]
    %v1678 = vld [vmem:[%s1667 + $0x50] sm:$0xff]
    %v1679 = vld [vmem:[%s1667 + $0x58] sm:$0xff]
    %v1680 = vld [vmem:[%s1667 + $0x60] sm:$0xff]
    %v1681 = vld [vmem:[%s1667 + $0x68] sm:$0xff]
    %v1682 = vld [vmem:[%s1667 + $0x70] sm:$0xff]
    %v1683 = vld [vmem:[%s1667 + $0x78] sm:$0xff]
    %v1684 = vld [vmem:[%s1667 + $0x80] sm:$0xff]
    %v1685 = vld [vmem:[%s1667 + $0x88] sm:$0xff]
    %v1686 = vld [vmem:[%s1667 + $0x90] sm:$0xff]
    %v1687 = vld [vmem:[%s1667 + $0x98] sm:$0xff]
    %v1688 = vld [vmem:[%s1667 + $0xa0] sm:$0xff]
    %v1689 = vld [vmem:[%s1667 + $0xa8] sm:$0xff]
    %v1690 = vld [vmem:[%s1667 + $0xb0] sm:$0xff]
    %v1691 = vld [vmem:[%s1667 + $0xb8] sm:$0xff]
    %v1692 = vld [vmem:[%s1667 + $0xc0] sm:$0xff]
    %v1693 = vld [vmem:[%s1667 + $0xc8] sm:$0xff]
    %v1694 = vld [vmem:[%s1667 + $0xd0] sm:$0xff]
    %v1695 = vld [vmem:[%s1667 + $0xd8] sm:$0xff]
    %v1696 = vld [vmem:[%s1667 + $0xe0] sm:$0xff]
    %v1697 = vld [vmem:[%s1667 + $0xe8] sm:$0xff]
    %v1698 = vld [vmem:[%s1667 + $0xf0] sm:$0xff]
    %v1699 = vld [vmem:[%s1667 + $0xf8] sm:$0xff]
    %v1700 = vunpack.c.l.bf16 %v1668
    %v1701 = vunpack.c.h.bf16 %v1668
    %v1702 = vunpack.c.l.bf16 %v1669
    %v1703 = vunpack.c.h.bf16 %v1669
    %v1704 = vunpack.c.l.bf16 %v1670
    %v1705 = vunpack.c.h.bf16 %v1670
    %v1706 = vunpack.c.l.bf16 %v1671
    %v1707 = vunpack.c.h.bf16 %v1671
    %v1708 = vunpack.c.l.bf16 %v1672
    %v1709 = vunpack.c.h.bf16 %v1672
    %v1710 = vunpack.c.l.bf16 %v1673
    %v1711 = vunpack.c.h.bf16 %v1673
    %v1712 = vunpack.c.l.bf16 %v1674
    %v1713 = vunpack.c.h.bf16 %v1674
    %v1714 = vunpack.c.l.bf16 %v1675
    %v1715 = vunpack.c.h.bf16 %v1675
    %v1716 = vunpack.c.l.bf16 %v1676
    %v1717 = vunpack.c.h.bf16 %v1676
    %v1718 = vunpack.c.l.bf16 %v1677
    %v1719 = vunpack.c.h.bf16 %v1677
    %v1720 = vunpack.c.l.bf16 %v1678
    %v1721 = vunpack.c.h.bf16 %v1678
    %v1722 = vunpack.c.l.bf16 %v1679
    %v1723 = vunpack.c.h.bf16 %v1679
    %v1724 = vunpack.c.l.bf16 %v1680
    %v1725 = vunpack.c.h.bf16 %v1680
    %v1726 = vunpack.c.l.bf16 %v1681
    %v1727 = vunpack.c.h.bf16 %v1681
    %v1728 = vunpack.c.l.bf16 %v1682
    %v1729 = vunpack.c.h.bf16 %v1682
    %v1730 = vunpack.c.l.bf16 %v1683
    %v1731 = vunpack.c.h.bf16 %v1683
    %v1732 = vunpack.c.l.bf16 %v1684
    %v1733 = vunpack.c.h.bf16 %v1684
    %v1734 = vunpack.c.l.bf16 %v1685
    %v1735 = vunpack.c.h.bf16 %v1685
    %v1736 = vunpack.c.l.bf16 %v1686
    %v1737 = vunpack.c.h.bf16 %v1686
    %v1738 = vunpack.c.l.bf16 %v1687
    %v1739 = vunpack.c.h.bf16 %v1687
    %v1740 = vunpack.c.l.bf16 %v1688
    %v1741 = vunpack.c.h.bf16 %v1688
    %v1742 = vunpack.c.l.bf16 %v1689
    %v1743 = vunpack.c.h.bf16 %v1689
    %v1744 = vunpack.c.l.bf16 %v1690
    %v1745 = vunpack.c.h.bf16 %v1690
    %v1746 = vunpack.c.l.bf16 %v1691
    %v1747 = vunpack.c.h.bf16 %v1691
    %v1748 = vunpack.c.l.bf16 %v1692
    %v1749 = vunpack.c.h.bf16 %v1692
    %v1750 = vunpack.c.l.bf16 %v1693
    %v1751 = vunpack.c.h.bf16 %v1693
    %v1752 = vunpack.c.l.bf16 %v1694
    %v1753 = vunpack.c.h.bf16 %v1694
    %v1754 = vunpack.c.l.bf16 %v1695
    %v1755 = vunpack.c.h.bf16 %v1695
    %v1756 = vunpack.c.l.bf16 %v1696
    %v1757 = vunpack.c.h.bf16 %v1696
    %v1758 = vunpack.c.l.bf16 %v1697
    %v1759 = vunpack.c.h.bf16 %v1697
    %v1760 = vunpack.c.l.bf16 %v1698
    %v1761 = vunpack.c.h.bf16 %v1698
    %v1762 = vunpack.c.l.bf16 %v1699
    %v1763 = vunpack.c.h.bf16 %v1699
    %1764 = vmatprep.subr.mxu0 %v1701
    %1765 = vmatpush1.msra.mxu0 %v1700
    %1766 = vmatprep.subr.mxu0 %v1703
    %1767 = vmatpush1.msra.mxu0 %v1702
    %1768 = vmatprep.subr.mxu0 %v1705
    %1769 = vmatpush1.msra.mxu0 %v1704
    %1770 = vmatprep.subr.mxu0 %v1707
    %1771 = vmatpush1.msra.mxu0 %v1706
    %1772 = vmatprep.subr.mxu0 %v1709
    %1773 = vmatpush1.msra.mxu0 %v1708
    %1774 = vmatprep.subr.mxu0 %v1711
    %1775 = vmatpush1.msra.mxu0 %v1710
    %1776 = vmatprep.subr.mxu0 %v1713
    %1777 = vmatpush1.msra.mxu0 %v1712
    %1778 = vmatprep.subr.mxu0 %v1715
    %1779 = vmatpush1.msra.mxu0 %v1714
    %1780 = vmatprep.subr.mxu0 %v1717
    %1781 = vmatpush1.msra.mxu0 %v1716
    %1782 = vmatprep.subr.mxu0 %v1719
    %1783 = vmatpush1.msra.mxu0 %v1718
    %1784 = vmatprep.subr.mxu0 %v1721
    %1785 = vmatpush1.msra.mxu0 %v1720
    %1786 = vmatprep.subr.mxu0 %v1723
    %1787 = vmatpush1.msra.mxu0 %v1722
    %1788 = vmatprep.subr.mxu0 %v1725
    %1789 = vmatpush1.msra.mxu0 %v1724
    %1790 = vmatprep.subr.mxu0 %v1727
    %1791 = vmatpush1.msra.mxu0 %v1726
    %1792 = vmatprep.subr.mxu0 %v1729
    %1793 = vmatpush1.msra.mxu0 %v1728
    %1794 = vmatprep.subr.mxu0 %v1731
    %1795 = vmatpush1.msra.mxu0 %v1730
    %1796 = vmatprep.subr.mxu0 %v1733
    %1797 = vmatpush1.msra.mxu0 %v1732
    %1798 = vmatprep.subr.mxu0 %v1735
    %1799 = vmatpush1.msra.mxu0 %v1734
    %1800 = vmatprep.subr.mxu0 %v1737
    %1801 = vmatpush1.msra.mxu0 %v1736
    %1802 = vmatprep.subr.mxu0 %v1739
    %1803 = vmatpush1.msra.mxu0 %v1738
    %1804 = vmatprep.subr.mxu0 %v1741
    %1805 = vmatpush1.msra.mxu0 %v1740
    %1806 = vmatprep.subr.mxu0 %v1743
    %1807 = vmatpush1.msra.mxu0 %v1742
    %1808 = vmatprep.subr.mxu0 %v1745
    %1809 = vmatpush1.msra.mxu0 %v1744
    %1810 = vmatprep.subr.mxu0 %v1747
    %1811 = vmatpush1.msra.mxu0 %v1746
    %1812 = vmatprep.subr.mxu0 %v1749
    %1813 = vmatpush1.msra.mxu0 %v1748
    %1814 = vmatprep.subr.mxu0 %v1751
    %1815 = vmatpush1.msra.mxu0 %v1750
    %1816 = vmatprep.subr.mxu0 %v1753
    %1817 = vmatpush1.msra.mxu0 %v1752
    %1818 = vmatprep.subr.mxu0 %v1755
    %1819 = vmatpush1.msra.mxu0 %v1754
    %1820 = vmatprep.subr.mxu0 %v1757
    %1821 = vmatpush1.msra.mxu0 %v1756
    %1822 = vmatprep.subr.mxu0 %v1759
    %1823 = vmatpush1.msra.mxu0 %v1758
    %1824 = vmatprep.subr.mxu0 %v1761
    %1825 = vmatpush1.msra.mxu0 %v1760
    %1826 = vmatprep.subr.mxu0 %v1763
    %1827 = vmatpush1.msra.mxu0 %v1762
    %1828 = vmatprep.mubr.f32.mxu0 %v1276
    %1829 = vmatmul.mubr.f32.gmra.mrb[0].mxu0 %v1274
    %v1830 = vpop.f32.mrb[0].mxu0
    %v1831 = vadd.f32 0.0, %v1830
    %v1832 = vpop.f32.mrb[0].mxu0
    %v1833 = vadd.f32 0.0, %v1832
    %1834 = vmatprep.mubr.f32.mxu0 %v1282
    %1835 = vmatmul.mubr.f32.gmra.mrb[0].mxu0 %v1280
    %v1836 = vpop.f32.mrb[0].mxu0
    %v1837 = vadd.f32 0.0, %v1836
    %v1838 = vpop.f32.mrb[0].mxu0
    %v1839 = vadd.f32 0.0, %v1838
    %1840 = vmatprep.mubr.f32.mxu0 %v1288
    %1841 = vmatmul.mubr.f32.gmra.mrb[0].mxu0 %v1286
    %v1842 = vpop.f32.mrb[0].mxu0
    %v1843 = vadd.f32 0.0, %v1842
    %v1844 = vpop.f32.mrb[0].mxu0
    %v1845 = vadd.f32 0.0, %v1844
    %1846 = vmatprep.mubr.f32.mxu0 %v1294
    %1847 = vmatmul.mubr.f32.gmra.mrb[0].mxu0 %v1292
    %v1848 = vpop.f32.mrb[0].mxu0
    %v1849 = vadd.f32 0.0, %v1848
    %v1850 = vpop.f32.mrb[0].mxu0
    %v1851 = vadd.f32 0.0, %v1850
    %1852 = vdwg.mxu0
    %v1853 = vadd.f32 %v1645, %v1831
    %v1854 = vadd.f32 %v1647, %v1833
    %v1855 = vadd.f32 %v1651, %v1837
    %v1856 = vadd.f32 %v1653, %v1839
    %v1857 = vadd.f32 %v1657, %v1843
    %v1858 = vadd.f32 %v1659, %v1845
    %v1859 = vadd.f32 %v1663, %v1849
    %v1860 = vadd.f32 %v1665, %v1851
    %v1862 = vlaneseq
    %v1863 = vshrl.u32 %v1862, 7
    %v1864 = vsub.s32 0, %v1863
    %v1865 = vrot.slane %v1117, %v1864
    %v1866 = vlaneseq
    %v1867 = vshrl.u32 %v1866, 7
    %v1868 = vsub.s32 1, %v1867
    %v1869 = vrot.slane %v1117, %v1868
    %v1872 = vadd.f32 %v1853, %v1865
    %v1873 = vadd.f32 %v1854, %v1869
    %v1874 = vadd.f32 %v1855, %v1865
    %v1875 = vadd.f32 %v1856, %v1869
    %v1876 = vadd.f32 %v1857, %v1865
    %v1877 = vadd.f32 %v1858, %v1869
    %v1878 = vadd.f32 %v1859, %v1865
    %v1879 = vadd.f32 %v1860, %v1869
    %v1880 = vld [vmem:[%s7] sm:$0x3]
    %v1881 = vld [vmem:[%s8] sm:$0x3]
    %v1882 = vadd.f32 %v1872, %v1874
    %v1883 = vadd.f32 %v1882, %v1876
    %v1884 = vadd.f32 %v1883, %v1878
    %v1885 = vrot.slane %v1884, 4
    %v1886 = vadd.f32 %v1884, %v1885
    %v1887 = vrot.slane %v1886, 2
    %v1888 = vadd.f32 %v1886, %v1887
    %v1889 = vrot.slane %v1888, 1
    %v1890 = vadd.f32 %v1888, %v1889
    %v1891 = vadd.f32 %v1873, %v1875
    %v1892 = vadd.f32 %v1891, %v1877
    %v1893 = vadd.f32 %v1892, %v1879
    %v1894 = vrot.slane %v1893, 4
    %v1895 = vadd.f32 %v1893, %v1894
    %v1896 = vrot.slane %v1895, 2
    %v1897 = vadd.f32 %v1895, %v1896
    %v1898 = vrot.slane %v1897, 1
    %v1899 = vadd.f32 %v1897, %v1898
    %v1900 = vmul.f32 %v1872, %v1872
    %v1901 = vmul.f32 %v1873, %v1873
    %v1902 = vmul.f32 %v1874, %v1874
    %v1903 = vmul.f32 %v1875, %v1875
    %v1904 = vmul.f32 %v1876, %v1876
    %v1905 = vmul.f32 %v1877, %v1877
    %v1906 = vmul.f32 %v1878, %v1878
    %v1907 = vmul.f32 %v1879, %v1879
    %v1908 = vadd.f32 %v1900, %v1902
    %v1909 = vadd.f32 %v1908, %v1904
    %v1910 = vadd.f32 %v1909, %v1906
    %v1911 = vrot.slane %v1910, 4
    %v1912 = vadd.f32 %v1910, %v1911
    %v1913 = vrot.slane %v1912, 2
    %v1914 = vadd.f32 %v1912, %v1913
    %v1915 = vrot.slane %v1914, 1
    %v1916 = vadd.f32 %v1914, %v1915
    %v1917 = vadd.f32 %v1901, %v1903
    %v1918 = vadd.f32 %v1917, %v1905
    %v1919 = vadd.f32 %v1918, %v1907
    %v1920 = vrot.slane %v1919, 4
    %v1921 = vadd.f32 %v1919, %v1920
    %v1922 = vrot.slane %v1921, 2
    %v1923 = vadd.f32 %v1921, %v1922
    %v1924 = vrot.slane %v1923, 1
    %v1925 = vadd.f32 %v1923, %v1924
    %v1926 = vsel %vm940, %v1890, %v1916
    %v1927 = vsel %vm940, %v1899, %v1925
    %1928 = vmatprep.subr.mxu0 %v191
    %1929 = vmatpush1.msra.mxu0 %v190
    %1930 = vmatprep.subr.mxu0 %v193
    %1931 = vmatpush1.msra.mxu0 %v192
    %1932 = vmatprep.subr.mxu0 %v195
    %1933 = vmatpush1.msra.mxu0 %v194
    %1934 = vmatprep.subr.mxu0 %v197
    %1935 = vmatpush1.msra.mxu0 %v196
    %1936 = vmatprep.subr.mxu0 %v199
    %1937 = vmatpush1.msra.mxu0 %v198
    %1938 = vmatprep.subr.mxu0 %v201
    %1939 = vmatpush1.msra.mxu0 %v200
    %1940 = vmatprep.subr.mxu0 %v203
    %1941 = vmatpush1.msra.mxu0 %v202
    %1942 = vmatprep.subr.mxu0 %v205
    %1943 = vmatpush1.msra.mxu0 %v204
    %1944 = vmatprep.subr.mxu0 %v207
    %1945 = vmatpush1.msra.mxu0 %v206
    %1946 = vmatprep.subr.mxu0 %v209
    %1947 = vmatpush1.msra.mxu0 %v208
    %1948 = vmatprep.subr.mxu0 %v211
    %1949 = vmatpush1.msra.mxu0 %v210
    %1950 = vmatprep.subr.mxu0 %v213
    %1951 = vmatpush1.msra.mxu0 %v212
    %1952 = vmatprep.subr.mxu0 %v215
    %1953 = vmatpush1.msra.mxu0 %v214
    %1954 = vmatprep.subr.mxu0 %v217
    %1955 = vmatpush1.msra.mxu0 %v216
    %1956 = vmatprep.subr.mxu0 %v219
    %1957 = vmatpush1.msra.mxu0 %v218
    %1958 = vmatprep.subr.mxu0 %v221
    %1959 = vmatpush1.msra.mxu0 %v220
    %1960 = vmatprep.subr.mxu0 %v223
    %1961 = vmatpush1.msra.mxu0 %v222
    %1962 = vmatprep.subr.mxu0 %v225
    %1963 = vmatpush1.msra.mxu0 %v224
    %1964 = vmatprep.subr.mxu0 %v227
    %1965 = vmatpush1.msra.mxu0 %v226
    %1966 = vmatprep.subr.mxu0 %v229
    %1967 = vmatpush1.msra.mxu0 %v228
    %1968 = vmatprep.subr.mxu0 %v231
    %1969 = vmatpush1.msra.mxu0 %v230
    %1970 = vmatprep.subr.mxu0 %v233
    %1971 = vmatpush1.msra.mxu0 %v232
    %1972 = vmatprep.subr.mxu0 %v235
    %1973 = vmatpush1.msra.mxu0 %v234
    %1974 = vmatprep.subr.mxu0 %v237
    %1975 = vmatpush1.msra.mxu0 %v236
    %1976 = vmatprep.subr.mxu0 %v239
    %1977 = vmatpush1.msra.mxu0 %v238
    %1978 = vmatprep.subr.mxu0 %v241
    %1979 = vmatpush1.msra.mxu0 %v240
    %1980 = vmatprep.subr.mxu0 %v243
    %1981 = vmatpush1.msra.mxu0 %v242
    %1982 = vmatprep.subr.mxu0 %v245
    %1983 = vmatpush1.msra.mxu0 %v244
    %1984 = vmatprep.subr.mxu0 %v247
    %1985 = vmatpush1.msra.mxu0 %v246
    %1986 = vmatprep.subr.mxu0 %v249
    %1987 = vmatpush1.msra.mxu0 %v248
    %1988 = vmatprep.subr.mxu0 %v251
    %1989 = vmatpush1.msra.mxu0 %v250
    %1990 = vmatprep.subr.mxu0 %v253
    %1991 = vmatpush1.msra.mxu0 %v252
    %1992 = vmatprep.mubr.f32.mxu0 %v1927
    %1993 = vmatmul.mubr.f32.gmra.mrb[0].mxu0 %v1926
    %v1994 = vpop.f32.mrb[0].mxu0
    %v1995 = vadd.f32 0.0, %v1994
    %v1996 = vpop.f32.mrb[0].mxu0
    %v1997 = vadd.f32 0.0, %v1996
    %1998 = vdwg.mxu0
    %v1999 = vmul.f32 %v1995, 0.001953125
    %v2000 = vmul.f32 %v1997, 0.001953125
    %v2001 = vmul.f32 %v1999, %v1999
    %v2002 = vmul.f32 %v2000, %v2000
    %v2005 = vrot.slane %v2001, 7
    %v2006 = vrot.slane %v2002, 7
    %v2009 = vsub.f32 %v1999, %v2005
    %v2010 = vsub.f32 %v2000, %v2006
    %v2011 = vadd.f32 %v2009, 1e-05
    %v2012 = vadd.f32 %v2010, 1e-05
    %v2013 = vrsqrt.pop %v2011
    %v2014 = vrsqrt.pop %v2012
    %v2017 = vcombine.low %v2013, %v2014
    %v2019 = vunpack.c.l.s4 1966171168
    %v2020 = vunpack.c.0.s8 %v2019
    %v2021 = vlaneseq
    %v2022 = vshrl.u32 %v2021, 7
    %v2023 = vsub.s32 %v2020, %v2022
    %v2024 = vrot.slane %v2017, %v2023
    %v2025 = vcombine.high %v2024, %v2024
    %v2027 = vunpack.c.l.s4 1966171168
    %v2028 = vunpack.c.0.s8 %v2027
    %v2029 = vlaneseq
    %v2030 = vshrl.u32 %v2029, 7
    %v2031 = vsub.s32 %v2028, %v2030
    %v2032 = vrot.slane %v2025, %v2031
    %v2034 = vmul.f32 %v1880, %v2032
    %v2036 = vlaneseq
    %v2037 = vshrl.u32 %v2036, 7
    %v2038 = vsub.s32 0, %v2037
    %v2039 = vrot.slane %v2034, %v2038
    %v2040 = vlaneseq
    %v2041 = vshrl.u32 %v2040, 7
    %v2042 = vsub.s32 1, %v2041
    %v2043 = vrot.slane %v2034, %v2042
    %v2046 = vmul.f32 %v1999, %v2039
    %v2047 = vmul.f32 %v2000, %v2043
    %v2050 = vcombine.low %v2046, %v2047
    %v2052 = vunpack.c.l.s4 1966171168
    %v2053 = vunpack.c.0.s8 %v2052
    %v2054 = vlaneseq
    %v2055 = vshrl.u32 %v2054, 7
    %v2056 = vsub.s32 %v2053, %v2055
    %v2057 = vrot.slane %v2050, %v2056
    %v2059 = vunpack.c.l.s4 1966171168
    %v2060 = vunpack.c.0.s8 %v2059
    %v2061 = vlaneseq
    %v2062 = vshrl.u32 %v2061, 7
    %v2063 = vsub.s32 %v2060, %v2062
    %v2064 = vrot.slane %v2057, %v2063
    %v2066 = vsub.f32 %v1881, %v2064
    %v2067 = vmul.f32 %v1872, %v2039
    %v2068 = vmul.f32 %v1873, %v2043
    %v2069 = vmul.f32 %v1874, %v2039
    %v2070 = vmul.f32 %v1875, %v2043
    %v2071 = vmul.f32 %v1876, %v2039
    %v2072 = vmul.f32 %v1877, %v2043
    %v2073 = vmul.f32 %v1878, %v2039
    %v2074 = vmul.f32 %v1879, %v2043
    %v2076 = vlaneseq
    %v2077 = vshrl.u32 %v2076, 7
    %v2078 = vsub.s32 0, %v2077
    %v2079 = vrot.slane %v2066, %v2078
    %v2080 = vlaneseq
    %v2081 = vshrl.u32 %v2080, 7
    %v2082 = vsub.s32 1, %v2081
    %v2083 = vrot.slane %v2066, %v2082
    %v2086 = vadd.f32 %v2067, %v2079
    %v2087 = vadd.f32 %v2068, %v2083
    %v2088 = vadd.f32 %v2069, %v2079
    %v2089 = vadd.f32 %v2070, %v2083
    %v2090 = vadd.f32 %v2071, %v2079
    %v2091 = vadd.f32 %v2072, %v2083
    %v2092 = vadd.f32 %v2073, %v2079
    %v2093 = vadd.f32 %v2074, %v2083
    %v2094 = vmax.f32 %v2086, 0.0
    %v2095 = vmax.f32 %v2087, 0.0
    %v2096 = vmax.f32 %v2088, 0.0
    %v2097 = vmax.f32 %v2089, 0.0
    %v2098 = vmax.f32 %v2090, 0.0
    %v2099 = vmax.f32 %v2091, 0.0
    %v2100 = vmax.f32 %v2092, 0.0
    %v2101 = vmax.f32 %v2093, 0.0
    %2102 = vst [vmem:[%s10] sm:$0xff] %v2094
    %2103 = vst [vmem:[%s10 + $0x8] sm:$0xff] %v2095
    %2104 = vst [vmem:[%s10 + $0x10] sm:$0xff] %v2096
    %2105 = vst [vmem:[%s10 + $0x18] sm:$0xff] %v2097
    %2106 = vst [vmem:[%s10 + $0x20] sm:$0xff] %v2098
    %2107 = vst [vmem:[%s10 + $0x28] sm:$0xff] %v2099
    %2108 = vst [vmem:[%s10 + $0x30] sm:$0xff] %v2100
    %2109 = vst [vmem:[%s10 + $0x38] sm:$0xff] %v2101
    // Predicated region
    $region50: #{encoder_decoder_block.1} parent=1 // pred_check
      _
    $region51: #{encoder_decoder_block.1} parent=1 // pred_check_branch
      %2111 = sbr.rel (0) target = $region53
    $region52: #{encoder_decoder_block.1} parent=1 // pred_region
      _
    $region53: #{encoder_decoder_block.1} parent=1 // pred_fallthru
      _
    // Predicated region
    $region54: #{encoder_decoder_block.1} parent=1 // pred_check
      _
    $region55: #{encoder_decoder_block.1} parent=1 // pred_check_branch
      %2113 = sbr.rel (0) target = $region57
    $region56: #{encoder_decoder_block.1} parent=1 // pred_region
      _
    $region57: #{encoder_decoder_block.1} parent=1 // pred_fallthru
      _
    %2114 = vsyncpa [#allocation3], 1
    %2115 = vsyncpa [#allocation5], 1

</llo_original>
